<compile_context>
chip_gen: v7x
topology: tpu7x:2x2x1
jax: 0.10.0
libtpu: 0.0.40
codegen_flags: <defaults>
</compile_context>

<pallas_src>
import functools
import math

import jax
import jax.numpy as jnp
from jax.experimental import pallas as pl
from jax.experimental.pallas import tpu as pltpu

_VMEM_LIMIT = 32 * 1024 * 1024  # safe on v5e/v6e (128 MiB phys) and v7x (64 MiB phys)


def _tile(dim, candidates):
    """Largest candidate tile that evenly divides `dim`; falls back to the full dim
    (single block) for small / unaligned sizes. Candidates are 8/128-aligned so the
    (sublane, lane) = (8, 128) block constraints are always satisfied."""
    for c in candidates:
        if c <= dim and dim % c == 0:
            return c
    return dim


# ----------------------------------------------------------------------------
# 1) Fused QKV projection: (B, N, C) -> (3, B, H, N, Dh), head split in the DMA
# ----------------------------------------------------------------------------
def _qkv_proj_kernel(x_ref, w_ref, b_ref, o_ref):
    # x_ref: (1, TN, C)  w_ref: (1, 1, C, Dh)  b_ref: (1, 1, 1, Dh)  o_ref: (1,1,1,TN,Dh)
    acc = jnp.dot(x_ref[0], w_ref[0, 0], preferred_element_type=jnp.float32)
    o_ref[0, 0, 0] = (acc + b_ref[0, 0].astype(jnp.float32)).astype(o_ref.dtype)


def qkv_project(x, w_qkv, b_qkv):
    B, N, C = x.shape
    _, heads, _, Dh = w_qkv.shape
    TN = _tile(N, (512, 256, 128))
    # TODO(synk): add a K(=C)-reduction grid axis here if C ever becomes too large
    # for a single (TN, C) block in VMEM.
    grid = (B, N // TN, 3, heads)
    return pl.pallas_call(
        _qkv_proj_kernel,
        out_shape=jax.ShapeDtypeStruct((3, B, heads, N, Dh), x.dtype),
        grid=grid,
        in_specs=[
            # x block reused across the inner (qkv, head) axes -> single DMA per (b, ni)
            pl.BlockSpec((1, TN, C), lambda b, ni, c, h: (b, ni, 0)),
            pl.BlockSpec((1, 1, C, Dh), lambda b, ni, c, h: (c, h, 0, 0)),
            pl.BlockSpec((1, 1, 1, Dh), lambda b, ni, c, h: (c, h, 0, 0)),
        ],
        out_specs=pl.BlockSpec((1, 1, 1, TN, Dh),
                               lambda b, ni, c, h: (c, b, h, ni, 0)),
        compiler_params=pltpu.CompilerParams(
            dimension_semantics=("parallel", "parallel", "arbitrary", "arbitrary"),
            vmem_limit_bytes=_VMEM_LIMIT),
    )(x, w_qkv, b_qkv)


# ----------------------------------------------------------------------------
# 2) Flash-style multi-head attention, writing a lane-dense (B, N, C) context
# ----------------------------------------------------------------------------
def _flash_attn_kernel(q_ref, k_ref, v_ref, o_ref, m_ref, l_ref, acc_ref, *, scale):
    # q_ref: (1,1,H,TQ,Dh)  k_ref/v_ref: (1,1,H,TK,Dh)  o_ref: (1,TQ,C)
    # scratch: m_ref/l_ref (H,TQ,1) f32, acc_ref (H,TQ,Dh) f32
    H = q_ref.shape[2]
    Dh = q_ref.shape[-1]
    ki = pl.program_id(2)
    nk = pl.num_programs(2)

    @pl.when(ki == 0)
    def _init():
        m_ref[...] = jnp.full_like(m_ref, -jnp.inf)
        l_ref[...] = jnp.zeros_like(l_ref)
        acc_ref[...] = jnp.zeros_like(acc_ref)

    for h in range(H):  # static unroll over heads (H is small)
        # Fold the softmax scale into Q: TQ*Dh multiplies instead of TQ*TK.
        q = q_ref[0, 0, h] * scale                     # (TQ, Dh), native dtype
        k = k_ref[0, 0, h]                             # (TK, Dh)
        v = v_ref[0, 0, h]                             # (TK, Dh)

        # QK^T via dot_general contracting last dims -> no k.T relayout on the XLU.
        s = jax.lax.dot_general(q, k, (((1,), (1,)), ((), ())),
                                preferred_element_type=jnp.float32)   # (TQ, TK) f32

        m_prev = m_ref[h]                              # (TQ, 1)
        m_new = jnp.maximum(m_prev, jnp.max(s, axis=-1, keepdims=True))
        alpha = jnp.exp(m_prev - m_new)
        p = jnp.exp(s - m_new)                         # f32
        l_ref[h] = alpha * l_ref[h] + jnp.sum(p, axis=-1, keepdims=True)
        acc_ref[h] = alpha * acc_ref[h] + jax.lax.dot_general(
            p.astype(v.dtype), v, (((1,), (0,)), ((), ())),
            preferred_element_type=jnp.float32)
        m_ref[h] = m_new

    @pl.when(ki == nk - 1)
    def _finalize():
        for h in range(H):
            l = l_ref[h]
            inv_l = pl.reciprocal(l, approx=True)      # EUP (free slot)
            inv_l = inv_l * (2.0 - l * inv_l)          # one Newton step -> f32 accuracy
            # Write the per-head slice of the lane-dense (TQ, C) output slab.
            o_ref[0, :, h * Dh:(h + 1) * Dh] = (acc_ref[h] * inv_l).astype(o_ref.dtype)


def flash_attention(qkv, scale):
    """qkv: (3, B, H, N, Dh) -> context laid out directly as (B, N, C=H*Dh)."""
    _, B, H, N, Dh = qkv.shape
    C = H * Dh
    # Tiles sized for a <=32 MiB scoped-VMEM budget (re-derive for v7x if H*Dh grows).
    TQ = _tile(N, (256, 128))
    TK = _tile(N, (256, 128))
    grid = (B, N // TQ, N // TK)   # KV-stream axis last ("arbitrary")

    q_spec = pl.BlockSpec((1, 1, H, TQ, Dh), lambda b, qi, ki: (0, b, 0, qi, 0))
    k_spec = pl.BlockSpec((1, 1, H, TK, Dh), lambda b, qi, ki: (1, b, 0, ki, 0))
    v_spec = pl.BlockSpec((1, 1, H, TK, Dh), lambda b, qi, ki: (2, b, 0, ki, 0))
    # Lane-dense output: last dim is the full C, written once at the last KV step.
    o_spec = pl.BlockSpec((1, TQ, C), lambda b, qi, ki: (b, qi, 0))
    # NOTE: deeper K/V buffering (pipeline_mode=pl.Buffered(3)) can help when Dh is
    # small; left at the default depth-2 double buffering here.

    return pl.pallas_call(
        functools.partial(_flash_attn_kernel, scale=scale),
        out_shape=jax.ShapeDtypeStruct((B, N, C), qkv.dtype),
        grid=grid,
        in_specs=[q_spec, k_spec, v_spec],
        out_specs=o_spec,
        scratch_shapes=[
            pltpu.VMEM((H, TQ, 1), jnp.float32),    # running max
            pltpu.VMEM((H, TQ, 1), jnp.float32),    # running denominator
            pltpu.VMEM((H, TQ, Dh), jnp.float32),   # un-normalized accumulator
        ],
        compiler_params=pltpu.CompilerParams(
            dimension_semantics=("parallel", "parallel", "arbitrary"),
            vmem_limit_bytes=_VMEM_LIMIT),
    )(qkv, qkv, qkv)


# ----------------------------------------------------------------------------
# 3) Tiled linear with K-reduction accumulator (used for the output projection)
# ----------------------------------------------------------------------------
def _linear_kernel(x_ref, w_ref, b_ref, o_ref, acc_ref):
    kk = pl.program_id(2)

    @pl.when(kk == 0)
    def _init():
        acc_ref[...] = jnp.zeros_like(acc_ref)

    acc_ref[...] += jnp.dot(x_ref[...], w_ref[...],
                            preferred_element_type=jnp.float32)

    @pl.when(kk == pl.num_programs(2) - 1)
    def _finalize():
        o_ref[...] = (acc_ref[...] + b_ref[...].astype(jnp.float32)).astype(o_ref.dtype)


def linear(x2d, w, b):
    """x2d: (M, K), w: (K, N), b: (N,) -> (M, N); tiled + pipelined."""
    M, K = x2d.shape
    N = w.shape[1]
    tm = _tile(M, (512, 256, 128))
    tn = _tile(N, (512, 256, 128))
    tk = _tile(K, (512, 256))
    grid = (M // tm, N // tn, K // tk)
    b2 = b.reshape(1, N)   # lane-dense 2-D bias block
    return pl.pallas_call(
        _linear_kernel,
        out_shape=jax.ShapeDtypeStruct((M, N), x2d.dtype),
        grid=grid,
        in_specs=[
            pl.BlockSpec((tm, tk), lambda i, j, k: (i, k)),
            pl.BlockSpec((tk, tn), lambda i, j, k: (k, j)),
            pl.BlockSpec((1, tn), lambda i, j, k: (0, j)),
        ],
        out_specs=pl.BlockSpec((tm, tn), lambda i, j, k: (i, j)),
        scratch_shapes=[pltpu.VMEM((tm, tn), jnp.float32)],
        compiler_params=pltpu.CompilerParams(
            dimension_semantics=("parallel", "parallel", "arbitrary"),
            vmem_limit_bytes=_VMEM_LIMIT),
    )(x2d, w, b2)


# ----------------------------------------------------------------------------
# Attention module forward (glue is only free reshapes — no HBM transposes)
# ----------------------------------------------------------------------------
def attention_forward(x, params, heads):
    B, N, C = x.shape
    assert C % heads == 0, "hid_size is not divisible by heads"

    qkv = qkv_project(x, params["w_qkv"], params["b_qkv"])   # (3, B, H, N, Dh)

    # NOTE: PyTorch module scales by 1/sqrt(hid_size) (NOT 1/sqrt(head_dim)).
    scale = 1.0 / math.sqrt(C)
    ctx = flash_attention(qkv, scale)                        # (B, N, C), lane-dense

    out = linear(ctx.reshape(B * N, C), params["w_proj"], params["b_proj"])
    return out.reshape(B, N, C)


def pack_qkv_params(w_qkv_2d, b_qkv_1d, heads):
    """(C, 3C)/(3C,) 'x @ W + b' convention -> kernel layout (3,H,C,Dh)/(3,H,1,Dh).
    One-time weight re-layout (done outside the per-token forward path)."""
    C = w_qkv_2d.shape[0]
    Dh = C // heads
    w4 = w_qkv_2d.reshape(C, 3, heads, Dh).transpose(1, 2, 0, 3)
    b4 = b_qkv_1d.reshape(3, heads, 1, Dh)
    return w4, b4


# ----------------------------------------------------------------------------
# Pure-JAX reference (mirrors the PyTorch module) for sanity checking
# ----------------------------------------------------------------------------
def attention_reference(x, params, heads):
    B, N, C = x.shape
    Dh = C // heads
    qkv = x @ params["w_qkv"] + params["b_qkv"]
    qkv = qkv.reshape(B, N, 3, heads, Dh).transpose(2, 0, 3, 1, 4)
    q, k, v = qkv[0], qkv[1], qkv[2]
    scores = jnp.einsum("bhnd,bhmd->bhnm", q, k) / math.sqrt(C)
    p = jax.nn.softmax(scores, axis=-1)
    ctx = jnp.einsum("bhnm,bhmd->bhnd", p, v)
    ctx = ctx.transpose(0, 2, 1, 3).reshape(B, N, C)
    return ctx @ params["w_proj"] + params["b_proj"]


if __name__ == "__main__":
    # Small shapes consistent with the module: batch=2, seq=8, hidden=32, heads=4
    B, N, C, heads = 2, 8, 32, 4

    key = jax.random.PRNGKey(0)
    kx, kq, kbq, kp, kbp = jax.random.split(key, 5)

    x = jax.random.normal(kx, (B, N, C), dtype=jnp.float32)
    w_qkv_2d = jax.random.normal(kq, (C, 3 * C), dtype=jnp.float32) / math.sqrt(C)
    b_qkv_1d = jax.random.normal(kbq, (3 * C,), dtype=jnp.float32) * 0.02
    w_proj = jax.random.normal(kp, (C, C), dtype=jnp.float32) / math.sqrt(C)
    b_proj = jax.random.normal(kbp, (C,), dtype=jnp.float32) * 0.02

    w_qkv4, b_qkv4 = pack_qkv_params(w_qkv_2d, b_qkv_1d, heads)
    kparams = {"w_qkv": w_qkv4, "b_qkv": b_qkv4, "w_proj": w_proj, "b_proj": b_proj}

    fwd = jax.jit(functools.partial(attention_forward, heads=heads))
    out = jax.block_until_ready(fwd(x, kparams))

    ref = attention_reference(
        x, {"w_qkv": w_qkv_2d, "b_qkv": b_qkv_1d, "w_proj": w_proj, "b_proj": b_proj},
        heads)

    assert out.shape == (B, N, C)
    assert jnp.allclose(out, ref, atol=1e-4, rtol=1e-4), "mismatch vs reference"

    print("KERNEL_OK")
</pallas_src>

<mosaic_0001>
module attributes {stable_mosaic.version = 11 : i64} {
  func.func @_linear_kernel(%arg0: i32, %arg1: i32, %arg2: i32, %arg3: memref<16x32xf32, #tpu.memory_space<vmem>>, %arg4: memref<32x32xf32, #tpu.memory_space<vmem>>, %arg5: memref<1x32xf32, #tpu.memory_space<vmem>>, %arg6: memref<16x32xf32, #tpu.memory_space<vmem>>, %arg7: memref<16x32xf32, #tpu.memory_space<vmem>>) attributes {dimension_semantics = [#tpu.dimension_semantics<parallel>, #tpu.dimension_semantics<parallel>, #tpu.dimension_semantics<arbitrary>], iteration_bounds = array<i64: 1, 1, 1>, scalar_prefetch = 0 : i64, scratch_operands = 1 : i64, tpu.core_type = #tpu.core_type<tc>, window_params = [{transform_indices = @transform_0, window_bounds = array<i64: 16, 32>}, {transform_indices = @transform_1, window_bounds = array<i64: 32, 32>}, {transform_indices = @transform_2, window_bounds = array<i64: 1, 32>}, {transform_indices = @transform_3, window_bounds = array<i64: 16, 32>}]} {
    %c0_i32 = arith.constant 0 : i32
    %0 = arith.cmpi eq, %arg2, %c0_i32 : i32
    %1 = arith.extui %0 : i1 to i32
    %c0_i32_0 = arith.constant 0 : i32
    %2 = arith.cmpi ne, %1, %c0_i32_0 : i32
    scf.if %2 {
      %cst_10 = arith.constant 0.000000e+00 : f32
      %12 = vector.broadcast %cst_10 : f32 to vector<16x32xf32>
      %c0_11 = arith.constant 0 : index
      %c0_12 = arith.constant 0 : index
      %13 = vector.load %arg7[%c0_11, %c0_12] : memref<16x32xf32, #tpu.memory_space<vmem>>, vector<16x32xf32>
      tpu.vector_store %arg7[%c0_11, %c0_12], %12 {strides = array<i32>} : memref<16x32xf32, #tpu.memory_space<vmem>>, vector<16x32xf32>,
    } else {
    }
    %c0 = arith.constant 0 : index
    %c0_1 = arith.constant 0 : index
    %3 = vector.load %arg7[%c0, %c0_1] : memref<16x32xf32, #tpu.memory_space<vmem>>, vector<16x32xf32>
    %c0_2 = arith.constant 0 : index
    %c0_3 = arith.constant 0 : index
    %4 = vector.load %arg3[%c0_2, %c0_3] : memref<16x32xf32, #tpu.memory_space<vmem>>, vector<16x32xf32>
    %c0_4 = arith.constant 0 : index
    %c0_5 = arith.constant 0 : index
    %5 = vector.load %arg4[%c0_4, %c0_5] : memref<32x32xf32, #tpu.memory_space<vmem>>, vector<32x32xf32>
    %cst = arith.constant dense<0.000000e+00> : vector<16x32xf32>
    %6 = tpu.matmul %4, %5, %cst {dimension_numbers = #tpu.dot_dimension_numbers<[1], [0], [0], [1], [0, 0, 1, 1], [], []>} : vector<16x32xf32>, vector<32x32xf32>, vector<16x32xf32> -> vector<16x32xf32>
    %7 = arith.addf %3, %6 : vector<16x32xf32>
    %c0_6 = arith.constant 0 : index
    %c0_7 = arith.constant 0 : index
    %8 = vector.load %arg7[%c0_6, %c0_7] : memref<16x32xf32, #tpu.memory_space<vmem>>, vector<16x32xf32>
    tpu.vector_store %arg7[%c0_6, %c0_7], %7 {strides = array<i32>} : memref<16x32xf32, #tpu.memory_space<vmem>>, vector<16x32xf32>,
    %c0_i32_8 = arith.constant 0 : i32
    %9 = arith.cmpi eq, %arg2, %c0_i32_8 : i32
    %10 = arith.extui %9 : i1 to i32
    %c0_i32_9 = arith.constant 0 : i32
    %11 = arith.cmpi ne, %10, %c0_i32_9 : i32
    scf.if %11 {
      %c0_10 = arith.constant 0 : index
      %c0_11 = arith.constant 0 : index
      %12 = vector.load %arg7[%c0_10, %c0_11] : memref<16x32xf32, #tpu.memory_space<vmem>>, vector<16x32xf32>
      %c0_12 = arith.constant 0 : index
      %c0_13 = arith.constant 0 : index
      %13 = vector.load %arg5[%c0_12, %c0_13] : memref<1x32xf32, #tpu.memory_space<vmem>>, vector<1x32xf32>
      %14 = vector.broadcast %13 : vector<1x32xf32> to vector<16x32xf32>
      %15 = arith.addf %12, %14 : vector<16x32xf32>
      %c0_14 = arith.constant 0 : index
      %c0_15 = arith.constant 0 : index
      %16 = vector.load %arg6[%c0_14, %c0_15] : memref<16x32xf32, #tpu.memory_space<vmem>>, vector<16x32xf32>
      tpu.vector_store %arg6[%c0_14, %c0_15], %15 {strides = array<i32>} : memref<16x32xf32, #tpu.memory_space<vmem>>, vector<16x32xf32>,
    } else {
    }
    return
  }
  func.func @transform_0(%arg0: i32, %arg1: i32, %arg2: i32) -> (i32, i32) {
    %c0_i32 = arith.constant 0 : i32
    return %arg0, %arg2 : i32, i32
  }
  func.func @transform_1(%arg0: i32, %arg1: i32, %arg2: i32) -> (i32, i32) {
    %c0_i32 = arith.constant 0 : i32
    return %arg2, %arg1 : i32, i32
  }
  func.func @transform_2(%arg0: i32, %arg1: i32, %arg2: i32) -> (i32, i32) {
    %c0_i32 = arith.constant 0 : i32
    %c0_i32_0 = arith.constant 0 : i32
    return %c0_i32, %arg1 : i32, i32
  }
  func.func @transform_3(%arg0: i32, %arg1: i32, %arg2: i32) -> (i32, i32) {
    %c0_i32 = arith.constant 0 : i32
    return %arg0, %arg1 : i32, i32
  }
}

module attributes {stable_mosaic.version = 11 : i64} {
  func.func @_qkv_proj_kernel(%arg0: i32, %arg1: i32, %arg2: i32, %arg3: i32, %arg4: memref<1x8x32xf32, #tpu.memory_space<vmem>>, %arg5: memref<1x1x32x8xf32, #tpu.memory_space<vmem>>, %arg6: memref<1x1x1x8xf32, #tpu.memory_space<vmem>>, %arg7: memref<1x1x1x8x8xf32, #tpu.memory_space<vmem>>) attributes {dimension_semantics = [#tpu.dimension_semantics<parallel>, #tpu.dimension_semantics<parallel>, #tpu.dimension_semantics<arbitrary>, #tpu.dimension_semantics<arbitrary>], iteration_bounds = array<i64: 2, 1, 3, 4>, scalar_prefetch = 0 : i64, scratch_operands = 0 : i64, tpu.core_type = #tpu.core_type<tc>, window_params = [{transform_indices = @transform_0, window_bounds = array<i64: 1, 8, 32>}, {transform_indices = @transform_1, window_bounds = array<i64: 1, 1, 32, 8>}, {transform_indices = @transform_2, window_bounds = array<i64: 1, 1, 1, 8>}, {transform_indices = @transform_3, window_bounds = array<i64: 1, 1, 1, 8, 8>}]} {
    %c0 = arith.constant 0 : index
    %c0_0 = arith.constant 0 : index
    %c0_1 = arith.constant 0 : index
    %0 = vector.load %arg4[%c0, %c0_0, %c0_1] : memref<1x8x32xf32, #tpu.memory_space<vmem>>, vector<1x8x32xf32>
    %1 = vector.shape_cast %0 : vector<1x8x32xf32> to vector<8x32xf32>
    %c0_2 = arith.constant 0 : index
    %c0_3 = arith.constant 0 : index
    %c0_4 = arith.constant 0 : index
    %c0_5 = arith.constant 0 : index
    %2 = vector.load %arg5[%c0_2, %c0_3, %c0_4, %c0_5] : memref<1x1x32x8xf32, #tpu.memory_space<vmem>>, vector<1x1x32x8xf32>
    %3 = vector.shape_cast %2 : vector<1x1x32x8xf32> to vector<32x8xf32>
    %cst = arith.constant dense<0.000000e+00> : vector<8x8xf32>
    %4 = tpu.matmul %1, %3, %cst {dimension_numbers = #tpu.dot_dimension_numbers<[1], [0], [0], [1], [0, 0, 1, 1], [], []>} : vector<8x32xf32>, vector<32x8xf32>, vector<8x8xf32> -> vector<8x8xf32>
    %c0_6 = arith.constant 0 : index
    %c0_7 = arith.constant 0 : index
    %c0_8 = arith.constant 0 : index
    %c0_9 = arith.constant 0 : index
    %5 = vector.load %arg6[%c0_6, %c0_7, %c0_8, %c0_9] : memref<1x1x1x8xf32, #tpu.memory_space<vmem>>, vector<1x1x1x8xf32>
    %6 = vector.shape_cast %5 : vector<1x1x1x8xf32> to vector<1x8xf32>
    %7 = vector.broadcast %6 : vector<1x8xf32> to vector<8x8xf32>
    %8 = arith.addf %4, %7 : vector<8x8xf32>
    %c0_10 = arith.constant 0 : index
    %c0_11 = arith.constant 0 : index
    %c0_12 = arith.constant 0 : index
    %c0_13 = arith.constant 0 : index
    %c0_14 = arith.constant 0 : index
    %9 = vector.load %arg7[%c0_10, %c0_11, %c0_12, %c0_13, %c0_14] : memref<1x1x1x8x8xf32, #tpu.memory_space<vmem>>, vector<1x1x1x8x8xf32>
    %10 = vector.shape_cast %9 : vector<1x1x1x8x8xf32> to vector<8x8xf32>
    %11 = vector.shape_cast %8 : vector<8x8xf32> to vector<1x1x1x8x8xf32>
    tpu.vector_store %arg7[%c0_10, %c0_11, %c0_12, %c0_13, %c0_14], %11 {strides = array<i32>} : memref<1x1x1x8x8xf32, #tpu.memory_space<vmem>>, vector<1x1x1x8x8xf32>,
    return
  }
  func.func @transform_0(%arg0: i32, %arg1: i32, %arg2: i32, %arg3: i32) -> (i32, i32, i32) {
    %c0_i32 = arith.constant 0 : i32
    %c0_i32_0 = arith.constant 0 : i32
    return %arg0, %arg1, %c0_i32 : i32, i32, i32
  }
  func.func @transform_1(%arg0: i32, %arg1: i32, %arg2: i32, %arg3: i32) -> (i32, i32, i32, i32) {
    %c0_i32 = arith.constant 0 : i32
    %c0_i32_0 = arith.constant 0 : i32
    %c0_i32_1 = arith.constant 0 : i32
    return %arg2, %arg3, %c0_i32, %c0_i32_0 : i32, i32, i32, i32
  }
  func.func @transform_2(%arg0: i32, %arg1: i32, %arg2: i32, %arg3: i32) -> (i32, i32, i32, i32) {
    %c0_i32 = arith.constant 0 : i32
    %c0_i32_0 = arith.constant 0 : i32
    %c0_i32_1 = arith.constant 0 : i32
    return %arg2, %arg3, %c0_i32, %c0_i32_0 : i32, i32, i32, i32
  }
  func.func @transform_3(%arg0: i32, %arg1: i32, %arg2: i32, %arg3: i32) -> (i32, i32, i32, i32, i32) {
    %c0_i32 = arith.constant 0 : i32
    %c0_i32_0 = arith.constant 0 : i32
    return %arg2, %arg0, %arg3, %arg1, %c0_i32 : i32, i32, i32, i32, i32
  }
}

module attributes {stable_mosaic.version = 11 : i64} {
  func.func @_flash_attn_kernel(%arg0: i32, %arg1: i32, %arg2: i32, %arg3: memref<1x1x4x8x8xf32, #tpu.memory_space<vmem>>, %arg4: memref<1x1x4x8x8xf32, #tpu.memory_space<vmem>>, %arg5: memref<1x1x4x8x8xf32, #tpu.memory_space<vmem>>, %arg6: memref<1x8x32xf32, #tpu.memory_space<vmem>>, %arg7: memref<4x8x1xf32, #tpu.memory_space<vmem>>, %arg8: memref<4x8x1xf32, #tpu.memory_space<vmem>>, %arg9: memref<4x8x8xf32, #tpu.memory_space<vmem>>) attributes {dimension_semantics = [#tpu.dimension_semantics<parallel>, #tpu.dimension_semantics<parallel>, #tpu.dimension_semantics<arbitrary>], iteration_bounds = array<i64: 2, 1, 1>, scalar_prefetch = 0 : i64, scratch_operands = 3 : i64, tpu.core_type = #tpu.core_type<tc>, window_params = [{transform_indices = @transform_0, window_bounds = array<i64: 1, 1, 4, 8, 8>}, {transform_indices = @transform_1, window_bounds = array<i64: 1, 1, 4, 8, 8>}, {transform_indices = @transform_2, window_bounds = array<i64: 1, 1, 4, 8, 8>}, {transform_indices = @transform_3, window_bounds = array<i64: 1, 8, 32>}]} {
    %c0_i32 = arith.constant 0 : i32
    %0 = arith.cmpi eq, %arg2, %c0_i32 : i32
    %1 = arith.extui %0 : i1 to i32
    %c0_i32_0 = arith.constant 0 : i32
    %2 = arith.cmpi ne, %1, %c0_i32_0 : i32
    scf.if %2 {
      %cst_150 = arith.constant 0xFF800000 : f32
      %166 = vector.broadcast %cst_150 : f32 to vector<4x8x1xf32>
      %c0_151 = arith.constant 0 : index
      %c0_152 = arith.constant 0 : index
      %c0_153 = arith.constant 0 : index
      %167 = vector.load %arg7[%c0_151, %c0_152, %c0_153] : memref<4x8x1xf32, #tpu.memory_space<vmem>>, vector<4x8x1xf32>
      tpu.vector_store %arg7[%c0_151, %c0_152, %c0_153], %166 {strides = array<i32>} : memref<4x8x1xf32, #tpu.memory_space<vmem>>, vector<4x8x1xf32>,
      %cst_154 = arith.constant 0.000000e+00 : f32
      %168 = vector.broadcast %cst_154 : f32 to vector<4x8x1xf32>
      %c0_155 = arith.constant 0 : index
      %c0_156 = arith.constant 0 : index
      %c0_157 = arith.constant 0 : index
      %169 = vector.load %arg8[%c0_155, %c0_156, %c0_157] : memref<4x8x1xf32, #tpu.memory_space<vmem>>, vector<4x8x1xf32>
      tpu.vector_store %arg8[%c0_155, %c0_156, %c0_157], %168 {strides = array<i32>} : memref<4x8x1xf32, #tpu.memory_space<vmem>>, vector<4x8x1xf32>,
      %cst_158 = arith.constant 0.000000e+00 : f32
      %170 = vector.broadcast %cst_158 : f32 to vector<4x8x8xf32>
      %c0_159 = arith.constant 0 : index
      %c0_160 = arith.constant 0 : index
      %c0_161 = arith.constant 0 : index
      %171 = vector.load %arg9[%c0_159, %c0_160, %c0_161] : memref<4x8x8xf32, #tpu.memory_space<vmem>>, vector<4x8x8xf32>
      tpu.vector_store %arg9[%c0_159, %c0_160, %c0_161], %170 {strides = array<i32>} : memref<4x8x8xf32, #tpu.memory_space<vmem>>, vector<4x8x8xf32>,
    } else {
    }
    %c0 = arith.constant 0 : index
    %c0_1 = arith.constant 0 : index
    %c0_2 = arith.constant 0 : index
    %c0_3 = arith.constant 0 : index
    %c0_4 = arith.constant 0 : index
    %3 = vector.load %arg3[%c0, %c0_1, %c0_2, %c0_3, %c0_4] : memref<1x1x4x8x8xf32, #tpu.memory_space<vmem>>, vector<1x1x1x8x8xf32>
    %4 = vector.shape_cast %3 : vector<1x1x1x8x8xf32> to vector<8x8xf32>
    %cst = arith.constant 0.176776692 : f32
    %5 = vector.broadcast %cst : f32 to vector<8x8xf32>
    %6 = arith.mulf %4, %5 : vector<8x8xf32>
    %c0_5 = arith.constant 0 : index
    %c0_6 = arith.constant 0 : index
    %c0_7 = arith.constant 0 : index
    %c0_8 = arith.constant 0 : index
    %c0_9 = arith.constant 0 : index
    %7 = vector.load %arg4[%c0_5, %c0_6, %c0_7, %c0_8, %c0_9] : memref<1x1x4x8x8xf32, #tpu.memory_space<vmem>>, vector<1x1x1x8x8xf32>
    %8 = vector.shape_cast %7 : vector<1x1x1x8x8xf32> to vector<8x8xf32>
    %c0_10 = arith.constant 0 : index
    %c0_11 = arith.constant 0 : index
    %c0_12 = arith.constant 0 : index
    %c0_13 = arith.constant 0 : index
    %c0_14 = arith.constant 0 : index
    %9 = vector.load %arg5[%c0_10, %c0_11, %c0_12, %c0_13, %c0_14] : memref<1x1x4x8x8xf32, #tpu.memory_space<vmem>>, vector<1x1x1x8x8xf32>
    %10 = vector.shape_cast %9 : vector<1x1x1x8x8xf32> to vector<8x8xf32>
    %cst_15 = arith.constant dense<0.000000e+00> : vector<8x8xf32>
    %11 = tpu.matmul %6, %8, %cst_15 {dimension_numbers = #tpu.dot_dimension_numbers<[1], [1], [0], [0], [0, 0, 1, 0], [], []>} : vector<8x8xf32>, vector<8x8xf32>, vector<8x8xf32> -> vector<8x8xf32>
    %c0_16 = arith.constant 0 : index
    %c0_17 = arith.constant 0 : index
    %c0_18 = arith.constant 0 : index
    %12 = vector.load %arg7[%c0_16, %c0_17, %c0_18] : memref<4x8x1xf32, #tpu.memory_space<vmem>>, vector<1x8x1xf32>
    %13 = vector.shape_cast %12 : vector<1x8x1xf32> to vector<8x1xf32>
    %cst_19 = arith.constant dense<0xFF800000> : vector<8xf32>
    %14 = vector.multi_reduction <maximumf>, %11, %cst_19 [1] : vector<8x8xf32> to vector<8xf32>
    %15 = vector.shape_cast %14 : vector<8xf32> to vector<8x1xf32>
    %16 = arith.maximumf %13, %15 : vector<8x1xf32>
    %17 = arith.subf %13, %16 : vector<8x1xf32>
    %18 = math.exp %17 : vector<8x1xf32>
    %19 = vector.broadcast %16 : vector<8x1xf32> to vector<8x8xf32>
    %20 = arith.subf %11, %19 : vector<8x8xf32>
    %21 = math.exp %20 : vector<8x8xf32>
    %c0_20 = arith.constant 0 : index
    %c0_21 = arith.constant 0 : index
    %c0_22 = arith.constant 0 : index
    %22 = vector.load %arg8[%c0_20, %c0_21, %c0_22] : memref<4x8x1xf32, #tpu.memory_space<vmem>>, vector<1x8x1xf32>
    %23 = vector.shape_cast %22 : vector<1x8x1xf32> to vector<8x1xf32>
    %24 = arith.mulf %18, %23 : vector<8x1xf32>
    %cst_23 = arith.constant dense<0.000000e+00> : vector<8xf32>
    %25 = vector.multi_reduction <add>, %21, %cst_23 [1] : vector<8x8xf32> to vector<8xf32>
    %26 = vector.shape_cast %25 : vector<8xf32> to vector<8x1xf32>
    %27 = arith.addf %24, %26 : vector<8x1xf32>
    %c0_24 = arith.constant 0 : index
    %c0_25 = arith.constant 0 : index
    %c0_26 = arith.constant 0 : index
    %28 = vector.load %arg8[%c0_24, %c0_25, %c0_26] : memref<4x8x1xf32, #tpu.memory_space<vmem>>, vector<1x8x1xf32>
    %29 = vector.shape_cast %28 : vector<1x8x1xf32> to vector<8x1xf32>
    %30 = vector.shape_cast %27 : vector<8x1xf32> to vector<1x8x1xf32>
    tpu.vector_store %arg8[%c0_24, %c0_25, %c0_26], %30 {strides = array<i32>} : memref<4x8x1xf32, #tpu.memory_space<vmem>>, vector<1x8x1xf32>,
    %c0_27 = arith.constant 0 : index
    %c0_28 = arith.constant 0 : index
    %c0_29 = arith.constant 0 : index
    %31 = vector.load %arg9[%c0_27, %c0_28, %c0_29] : memref<4x8x8xf32, #tpu.memory_space<vmem>>, vector<1x8x8xf32>
    %32 = vector.shape_cast %31 : vector<1x8x8xf32> to vector<8x8xf32>
    %33 = vector.broadcast %18 : vector<8x1xf32> to vector<8x8xf32>
    %34 = arith.mulf %33, %32 : vector<8x8xf32>
    %cst_30 = arith.constant dense<0.000000e+00> : vector<8x8xf32>
    %35 = tpu.matmul %21, %10, %cst_30 {dimension_numbers = #tpu.dot_dimension_numbers<[1], [0], [0], [1], [0, 0, 1, 1], [], []>} : vector<8x8xf32>, vector<8x8xf32>, vector<8x8xf32> -> vector<8x8xf32>
    %36 = arith.addf %34, %35 : vector<8x8xf32>
    %c0_31 = arith.constant 0 : index
    %c0_32 = arith.constant 0 : index
    %c0_33 = arith.constant 0 : index
    %37 = vector.load %arg9[%c0_31, %c0_32, %c0_33] : memref<4x8x8xf32, #tpu.memory_space<vmem>>, vector<1x8x8xf32>
    %38 = vector.shape_cast %37 : vector<1x8x8xf32> to vector<8x8xf32>
    %39 = vector.shape_cast %36 : vector<8x8xf32> to vector<1x8x8xf32>
    tpu.vector_store %arg9[%c0_31, %c0_32, %c0_33], %39 {strides = array<i32>} : memref<4x8x8xf32, #tpu.memory_space<vmem>>, vector<1x8x8xf32>,
    %c0_34 = arith.constant 0 : index
    %c0_35 = arith.constant 0 : index
    %c0_36 = arith.constant 0 : index
    %40 = vector.load %arg7[%c0_34, %c0_35, %c0_36] : memref<4x8x1xf32, #tpu.memory_space<vmem>>, vector<1x8x1xf32>
    %41 = vector.shape_cast %40 : vector<1x8x1xf32> to vector<8x1xf32>
    %42 = vector.shape_cast %16 : vector<8x1xf32> to vector<1x8x1xf32>
    tpu.vector_store %arg7[%c0_34, %c0_35, %c0_36], %42 {strides = array<i32>} : memref<4x8x1xf32, #tpu.memory_space<vmem>>, vector<1x8x1xf32>,
    %c0_37 = arith.constant 0 : index
    %c0_38 = arith.constant 0 : index
    %c1 = arith.constant 1 : index
    %c0_39 = arith.constant 0 : index
    %c0_40 = arith.constant 0 : index
    %43 = vector.load %arg3[%c0_37, %c0_38, %c1, %c0_39, %c0_40] : memref<1x1x4x8x8xf32, #tpu.memory_space<vmem>>, vector<1x1x1x8x8xf32>
    %44 = vector.shape_cast %43 : vector<1x1x1x8x8xf32> to vector<8x8xf32>
    %cst_41 = arith.constant 0.176776692 : f32
    %45 = vector.broadcast %cst_41 : f32 to vector<8x8xf32>
    %46 = arith.mulf %44, %45 : vector<8x8xf32>
    %c0_42 = arith.constant 0 : index
    %c0_43 = arith.constant 0 : index
    %c1_44 = arith.constant 1 : index
    %c0_45 = arith.constant 0 : index
    %c0_46 = arith.constant 0 : index
    %47 = vector.load %arg4[%c0_42, %c0_43, %c1_44, %c0_45, %c0_46] : memref<1x1x4x8x8xf32, #tpu.memory_space<vmem>>, vector<1x1x1x8x8xf32>
    %48 = vector.shape_cast %47 : vector<1x1x1x8x8xf32> to vector<8x8xf32>
    %c0_47 = arith.constant 0 : index
    %c0_48 = arith.constant 0 : index
    %c1_49 = arith.constant 1 : index
    %c0_50 = arith.constant 0 : index
    %c0_51 = arith.constant 0 : index
    %49 = vector.load %arg5[%c0_47, %c0_48, %c1_49, %c0_50, %c0_51] : memref<1x1x4x8x8xf32, #tpu.memory_space<vmem>>, vector<1x1x1x8x8xf32>
    %50 = vector.shape_cast %49 : vector<1x1x1x8x8xf32> to vector<8x8xf32>
    %cst_52 = arith.constant dense<0.000000e+00> : vector<8x8xf32>
    %51 = tpu.matmul %46, %48, %cst_52 {dimension_numbers = #tpu.dot_dimension_numbers<[1], [1], [0], [0], [0, 0, 1, 0], [], []>} : vector<8x8xf32>, vector<8x8xf32>, vector<8x8xf32> -> vector<8x8xf32>
    %c1_53 = arith.constant 1 : index
    %c0_54 = arith.constant 0 : index
    %c0_55 = arith.constant 0 : index
    %52 = vector.load %arg7[%c1_53, %c0_54, %c0_55] : memref<4x8x1xf32, #tpu.memory_space<vmem>>, vector<1x8x1xf32>
    %53 = vector.shape_cast %52 : vector<1x8x1xf32> to vector<8x1xf32>
    %cst_56 = arith.constant dense<0xFF800000> : vector<8xf32>
    %54 = vector.multi_reduction <maximumf>, %51, %cst_56 [1] : vector<8x8xf32> to vector<8xf32>
    %55 = vector.shape_cast %54 : vector<8xf32> to vector<8x1xf32>
    %56 = arith.maximumf %53, %55 : vector<8x1xf32>
    %57 = arith.subf %53, %56 : vector<8x1xf32>
    %58 = math.exp %57 : vector<8x1xf32>
    %59 = vector.broadcast %56 : vector<8x1xf32> to vector<8x8xf32>
    %60 = arith.subf %51, %59 : vector<8x8xf32>
    %61 = math.exp %60 : vector<8x8xf32>
    %c1_57 = arith.constant 1 : index
    %c0_58 = arith.constant 0 : index
    %c0_59 = arith.constant 0 : index
    %62 = vector.load %arg8[%c1_57, %c0_58, %c0_59] : memref<4x8x1xf32, #tpu.memory_space<vmem>>, vector<1x8x1xf32>
    %63 = vector.shape_cast %62 : vector<1x8x1xf32> to vector<8x1xf32>
    %64 = arith.mulf %58, %63 : vector<8x1xf32>
    %cst_60 = arith.constant dense<0.000000e+00> : vector<8xf32>
    %65 = vector.multi_reduction <add>, %61, %cst_60 [1] : vector<8x8xf32> to vector<8xf32>
    %66 = vector.shape_cast %65 : vector<8xf32> to vector<8x1xf32>
    %67 = arith.addf %64, %66 : vector<8x1xf32>
    %c1_61 = arith.constant 1 : index
    %c0_62 = arith.constant 0 : index
    %c0_63 = arith.constant 0 : index
    %68 = vector.load %arg8[%c1_61, %c0_62, %c0_63] : memref<4x8x1xf32, #tpu.memory_space<vmem>>, vector<1x8x1xf32>
    %69 = vector.shape_cast %68 : vector<1x8x1xf32> to vector<8x1xf32>
    %70 = vector.shape_cast %67 : vector<8x1xf32> to vector<1x8x1xf32>
    tpu.vector_store %arg8[%c1_61, %c0_62, %c0_63], %70 {strides = array<i32>} : memref<4x8x1xf32, #tpu.memory_space<vmem>>, vector<1x8x1xf32>,
    %c1_64 = arith.constant 1 : index
    %c0_65 = arith.constant 0 : index
    %c0_66 = arith.constant 0 : index
    %71 = vector.load %arg9[%c1_64, %c0_65, %c0_66] : memref<4x8x8xf32, #tpu.memory_space<vmem>>, vector<1x8x8xf32>
    %72 = vector.shape_cast %71 : vector<1x8x8xf32> to vector<8x8xf32>
    %73 = vector.broadcast %58 : vector<8x1xf32> to vector<8x8xf32>
    %74 = arith.mulf %73, %72 : vector<8x8xf32>
    %cst_67 = arith.constant dense<0.000000e+00> : vector<8x8xf32>
    %75 = tpu.matmul %61, %50, %cst_67 {dimension_numbers = #tpu.dot_dimension_numbers<[1], [0], [0], [1], [0, 0, 1, 1], [], []>} : vector<8x8xf32>, vector<8x8xf32>, vector<8x8xf32> -> vector<8x8xf32>
    %76 = arith.addf %74, %75 : vector<8x8xf32>
    %c1_68 = arith.constant 1 : index
    %c0_69 = arith.constant 0 : index
    %c0_70 = arith.constant 0 : index
    %77 = vector.load %arg9[%c1_68, %c0_69, %c0_70] : memref<4x8x8xf32, #tpu.memory_space<vmem>>, vector<1x8x8xf32>
    %78 = vector.shape_cast %77 : vector<1x8x8xf32> to vector<8x8xf32>
    %79 = vector.shape_cast %76 : vector<8x8xf32> to vector<1x8x8xf32>
    tpu.vector_store %arg9[%c1_68, %c0_69, %c0_70], %79 {strides = array<i32>} : memref<4x8x8xf32, #tpu.memory_space<vmem>>, vector<1x8x8xf32>,
    %c1_71 = arith.constant 1 : index
    %c0_72 = arith.constant 0 : index
    %c0_73 = arith.constant 0 : index
    %80 = vector.load %arg7[%c1_71, %c0_72, %c0_73] : memref<4x8x1xf32, #tpu.memory_space<vmem>>, vector<1x8x1xf32>
    %81 = vector.shape_cast %80 : vector<1x8x1xf32> to vector<8x1xf32>
    %82 = vector.shape_cast %56 : vector<8x1xf32> to vector<1x8x1xf32>
    tpu.vector_store %arg7[%c1_71, %c0_72, %c0_73], %82 {strides = array<i32>} : memref<4x8x1xf32, #tpu.memory_space<vmem>>, vector<1x8x1xf32>,
    %c0_74 = arith.constant 0 : index
    %c0_75 = arith.constant 0 : index
    %c2 = arith.constant 2 : index
    %c0_76 = arith.constant 0 : index
    %c0_77 = arith.constant 0 : index
    %83 = vector.load %arg3[%c0_74, %c0_75, %c2, %c0_76, %c0_77] : memref<1x1x4x8x8xf32, #tpu.memory_space<vmem>>, vector<1x1x1x8x8xf32>
    %84 = vector.shape_cast %83 : vector<1x1x1x8x8xf32> to vector<8x8xf32>
    %cst_78 = arith.constant 0.176776692 : f32
    %85 = vector.broadcast %cst_78 : f32 to vector<8x8xf32>
    %86 = arith.mulf %84, %85 : vector<8x8xf32>
    %c0_79 = arith.constant 0 : index
    %c0_80 = arith.constant 0 : index
    %c2_81 = arith.constant 2 : index
    %c0_82 = arith.constant 0 : index
    %c0_83 = arith.constant 0 : index
    %87 = vector.load %arg4[%c0_79, %c0_80, %c2_81, %c0_82, %c0_83] : memref<1x1x4x8x8xf32, #tpu.memory_space<vmem>>, vector<1x1x1x8x8xf32>
    %88 = vector.shape_cast %87 : vector<1x1x1x8x8xf32> to vector<8x8xf32>
    %c0_84 = arith.constant 0 : index
    %c0_85 = arith.constant 0 : index
    %c2_86 = arith.constant 2 : index
    %c0_87 = arith.constant 0 : index
    %c0_88 = arith.constant 0 : index
    %89 = vector.load %arg5[%c0_84, %c0_85, %c2_86, %c0_87, %c0_88] : memref<1x1x4x8x8xf32, #tpu.memory_space<vmem>>, vector<1x1x1x8x8xf32>
    %90 = vector.shape_cast %89 : vector<1x1x1x8x8xf32> to vector<8x8xf32>
    %cst_89 = arith.constant dense<0.000000e+00> : vector<8x8xf32>
    %91 = tpu.matmul %86, %88, %cst_89 {dimension_numbers = #tpu.dot_dimension_numbers<[1], [1], [0], [0], [0, 0, 1, 0], [], []>} : vector<8x8xf32>, vector<8x8xf32>, vector<8x8xf32> -> vector<8x8xf32>
    %c2_90 = arith.constant 2 : index
    %c0_91 = arith.constant 0 : index
    %c0_92 = arith.constant 0 : index
    %92 = vector.load %arg7[%c2_90, %c0_91, %c0_92] : memref<4x8x1xf32, #tpu.memory_space<vmem>>, vector<1x8x1xf32>
    %93 = vector.shape_cast %92 : vector<1x8x1xf32> to vector<8x1xf32>
    %cst_93 = arith.constant dense<0xFF800000> : vector<8xf32>
    %94 = vector.multi_reduction <maximumf>, %91, %cst_93 [1] : vector<8x8xf32> to vector<8xf32>
    %95 = vector.shape_cast %94 : vector<8xf32> to vector<8x1xf32>
    %96 = arith.maximumf %93, %95 : vector<8x1xf32>
    %97 = arith.subf %93, %96 : vector<8x1xf32>
    %98 = math.exp %97 : vector<8x1xf32>
    %99 = vector.broadcast %96 : vector<8x1xf32> to vector<8x8xf32>
    %100 = arith.subf %91, %99 : vector<8x8xf32>
    %101 = math.exp %100 : vector<8x8xf32>
    %c2_94 = arith.constant 2 : index
    %c0_95 = arith.constant 0 : index
    %c0_96 = arith.constant 0 : index
    %102 = vector.load %arg8[%c2_94, %c0_95, %c0_96] : memref<4x8x1xf32, #tpu.memory_space<vmem>>, vector<1x8x1xf32>
    %103 = vector.shape_cast %102 : vector<1x8x1xf32> to vector<8x1xf32>
    %104 = arith.mulf %98, %103 : vector<8x1xf32>
    %cst_97 = arith.constant dense<0.000000e+00> : vector<8xf32>
    %105 = vector.multi_reduction <add>, %101, %cst_97 [1] : vector<8x8xf32> to vector<8xf32>
    %106 = vector.shape_cast %105 : vector<8xf32> to vector<8x1xf32>
    %107 = arith.addf %104, %106 : vector<8x1xf32>
    %c2_98 = arith.constant 2 : index
    %c0_99 = arith.constant 0 : index
    %c0_100 = arith.constant 0 : index
    %108 = vector.load %arg8[%c2_98, %c0_99, %c0_100] : memref<4x8x1xf32, #tpu.memory_space<vmem>>, vector<1x8x1xf32>
    %109 = vector.shape_cast %108 : vector<1x8x1xf32> to vector<8x1xf32>
    %110 = vector.shape_cast %107 : vector<8x1xf32> to vector<1x8x1xf32>
    tpu.vector_store %arg8[%c2_98, %c0_99, %c0_100], %110 {strides = array<i32>} : memref<4x8x1xf32, #tpu.memory_space<vmem>>, vector<1x8x1xf32>,
    %c2_101 = arith.constant 2 : index
    %c0_102 = arith.constant 0 : index
    %c0_103 = arith.constant 0 : index
    %111 = vector.load %arg9[%c2_101, %c0_102, %c0_103] : memref<4x8x8xf32, #tpu.memory_space<vmem>>, vector<1x8x8xf32>
    %112 = vector.shape_cast %111 : vector<1x8x8xf32> to vector<8x8xf32>
    %113 = vector.broadcast %98 : vector<8x1xf32> to vector<8x8xf32>
    %114 = arith.mulf %113, %112 : vector<8x8xf32>
    %cst_104 = arith.constant dense<0.000000e+00> : vector<8x8xf32>
    %115 = tpu.matmul %101, %90, %cst_104 {dimension_numbers = #tpu.dot_dimension_numbers<[1], [0], [0], [1], [0, 0, 1, 1], [], []>} : vector<8x8xf32>, vector<8x8xf32>, vector<8x8xf32> -> vector<8x8xf32>
    %116 = arith.addf %114, %115 : vector<8x8xf32>
    %c2_105 = arith.constant 2 : index
    %c0_106 = arith.constant 0 : index
    %c0_107 = arith.constant 0 : index
    %117 = vector.load %arg9[%c2_105, %c0_106, %c0_107] : memref<4x8x8xf32, #tpu.memory_space<vmem>>, vector<1x8x8xf32>
    %118 = vector.shape_cast %117 : vector<1x8x8xf32> to vector<8x8xf32>
    %119 = vector.shape_cast %116 : vector<8x8xf32> to vector<1x8x8xf32>
    tpu.vector_store %arg9[%c2_105, %c0_106, %c0_107], %119 {strides = array<i32>} : memref<4x8x8xf32, #tpu.memory_space<vmem>>, vector<1x8x8xf32>,
    %c2_108 = arith.constant 2 : index
    %c0_109 = arith.constant 0 : index
    %c0_110 = arith.constant 0 : index
    %120 = vector.load %arg7[%c2_108, %c0_109, %c0_110] : memref<4x8x1xf32, #tpu.memory_space<vmem>>, vector<1x8x1xf32>
    %121 = vector.shape_cast %120 : vector<1x8x1xf32> to vector<8x1xf32>
    %122 = vector.shape_cast %96 : vector<8x1xf32> to vector<1x8x1xf32>
    tpu.vector_store %arg7[%c2_108, %c0_109, %c0_110], %122 {strides = array<i32>} : memref<4x8x1xf32, #tpu.memory_space<vmem>>, vector<1x8x1xf32>,
    %c0_111 = arith.constant 0 : index
    %c0_112 = arith.constant 0 : index
    %c3 = arith.constant 3 : index
    %c0_113 = arith.constant 0 : index
    %c0_114 = arith.constant 0 : index
    %123 = vector.load %arg3[%c0_111, %c0_112, %c3, %c0_113, %c0_114] : memref<1x1x4x8x8xf32, #tpu.memory_space<vmem>>, vector<1x1x1x8x8xf32>
    %124 = vector.shape_cast %123 : vector<1x1x1x8x8xf32> to vector<8x8xf32>
    %cst_115 = arith.constant 0.176776692 : f32
    %125 = vector.broadcast %cst_115 : f32 to vector<8x8xf32>
    %126 = arith.mulf %124, %125 : vector<8x8xf32>
    %c0_116 = arith.constant 0 : index
    %c0_117 = arith.constant 0 : index
    %c3_118 = arith.constant 3 : index
    %c0_119 = arith.constant 0 : index
    %c0_120 = arith.constant 0 : index
    %127 = vector.load %arg4[%c0_116, %c0_117, %c3_118, %c0_119, %c0_120] : memref<1x1x4x8x8xf32, #tpu.memory_space<vmem>>, vector<1x1x1x8x8xf32>
    %128 = vector.shape_cast %127 : vector<1x1x1x8x8xf32> to vector<8x8xf32>
    %c0_121 = arith.constant 0 : index
    %c0_122 = arith.constant 0 : index
    %c3_123 = arith.constant 3 : index
    %c0_124 = arith.constant 0 : index
    %c0_125 = arith.constant 0 : index
    %129 = vector.load %arg5[%c0_121, %c0_122, %c3_123, %c0_124, %c0_125] : memref<1x1x4x8x8xf32, #tpu.memory_space<vmem>>, vector<1x1x1x8x8xf32>
    %130 = vector.shape_cast %129 : vector<1x1x1x8x8xf32> to vector<8x8xf32>
    %cst_126 = arith.constant dense<0.000000e+00> : vector<8x8xf32>
    %131 = tpu.matmul %126, %128, %cst_126 {dimension_numbers = #tpu.dot_dimension_numbers<[1], [1], [0], [0], [0, 0, 1, 0], [], []>} : vector<8x8xf32>, vector<8x8xf32>, vector<8x8xf32> -> vector<8x8xf32>
    %c3_127 = arith.constant 3 : index
    %c0_128 = arith.constant 0 : index
    %c0_129 = arith.constant 0 : index
    %132 = vector.load %arg7[%c3_127, %c0_128, %c0_129] : memref<4x8x1xf32, #tpu.memory_space<vmem>>, vector<1x8x1xf32>
    %133 = vector.shape_cast %132 : vector<1x8x1xf32> to vector<8x1xf32>
    %cst_130 = arith.constant dense<0xFF800000> : vector<8xf32>
    %134 = vector.multi_reduction <maximumf>, %131, %cst_130 [1] : vector<8x8xf32> to vector<8xf32>
    %135 = vector.shape_cast %134 : vector<8xf32> to vector<8x1xf32>
    %136 = arith.maximumf %133, %135 : vector<8x1xf32>
    %137 = arith.subf %133, %136 : vector<8x1xf32>
    %138 = math.exp %137 : vector<8x1xf32>
    %139 = vector.broadcast %136 : vector<8x1xf32> to vector<8x8xf32>
    %140 = arith.subf %131, %139 : vector<8x8xf32>
    %141 = math.exp %140 : vector<8x8xf32>
    %c3_131 = arith.constant 3 : index
    %c0_132 = arith.constant 0 : index
    %c0_133 = arith.constant 0 : index
    %142 = vector.load %arg8[%c3_131, %c0_132, %c0_133] : memref<4x8x1xf32, #tpu.memory_space<vmem>>, vector<1x8x1xf32>
    %143 = vector.shape_cast %142 : vector<1x8x1xf32> to vector<8x1xf32>
    %144 = arith.mulf %138, %143 : vector<8x1xf32>
    %cst_134 = arith.constant dense<0.000000e+00> : vector<8xf32>
    %145 = vector.multi_reduction <add>, %141, %cst_134 [1] : vector<8x8xf32> to vector<8xf32>
    %146 = vector.shape_cast %145 : vector<8xf32> to vector<8x1xf32>
    %147 = arith.addf %144, %146 : vector<8x1xf32>
    %c3_135 = arith.constant 3 : index
    %c0_136 = arith.constant 0 : index
    %c0_137 = arith.constant 0 : index
    %148 = vector.load %arg8[%c3_135, %c0_136, %c0_137] : memref<4x8x1xf32, #tpu.memory_space<vmem>>, vector<1x8x1xf32>
    %149 = vector.shape_cast %148 : vector<1x8x1xf32> to vector<8x1xf32>
    %150 = vector.shape_cast %147 : vector<8x1xf32> to vector<1x8x1xf32>
    tpu.vector_store %arg8[%c3_135, %c0_136, %c0_137], %150 {strides = array<i32>} : memref<4x8x1xf32, #tpu.memory_space<vmem>>, vector<1x8x1xf32>,
    %c3_138 = arith.constant 3 : index
    %c0_139 = arith.constant 0 : index
    %c0_140 = arith.constant 0 : index
    %151 = vector.load %arg9[%c3_138, %c0_139, %c0_140] : memref<4x8x8xf32, #tpu.memory_space<vmem>>, vector<1x8x8xf32>
    %152 = vector.shape_cast %151 : vector<1x8x8xf32> to vector<8x8xf32>
    %153 = vector.broadcast %138 : vector<8x1xf32> to vector<8x8xf32>
    %154 = arith.mulf %153, %152 : vector<8x8xf32>
    %cst_141 = arith.constant dense<0.000000e+00> : vector<8x8xf32>
    %155 = tpu.matmul %141, %130, %cst_141 {dimension_numbers = #tpu.dot_dimension_numbers<[1], [0], [0], [1], [0, 0, 1, 1], [], []>} : vector<8x8xf32>, vector<8x8xf32>, vector<8x8xf32> -> vector<8x8xf32>
    %156 = arith.addf %154, %155 : vector<8x8xf32>
    %c3_142 = arith.constant 3 : index
    %c0_143 = arith.constant 0 : index
    %c0_144 = arith.constant 0 : index
    %157 = vector.load %arg9[%c3_142, %c0_143, %c0_144] : memref<4x8x8xf32, #tpu.memory_space<vmem>>, vector<1x8x8xf32>
    %158 = vector.shape_cast %157 : vector<1x8x8xf32> to vector<8x8xf32>
    %159 = vector.shape_cast %156 : vector<8x8xf32> to vector<1x8x8xf32>
    tpu.vector_store %arg9[%c3_142, %c0_143, %c0_144], %159 {strides = array<i32>} : memref<4x8x8xf32, #tpu.memory_space<vmem>>, vector<1x8x8xf32>,
    %c3_145 = arith.constant 3 : index
    %c0_146 = arith.constant 0 : index
    %c0_147 = arith.constant 0 : index
    %160 = vector.load %arg7[%c3_145, %c0_146, %c0_147] : memref<4x8x1xf32, #tpu.memory_space<vmem>>, vector<1x8x1xf32>
    %161 = vector.shape_cast %160 : vector<1x8x1xf32> to vector<8x1xf32>
    %162 = vector.shape_cast %136 : vector<8x1xf32> to vector<1x8x1xf32>
    tpu.vector_store %arg7[%c3_145, %c0_146, %c0_147], %162 {strides = array<i32>} : memref<4x8x1xf32, #tpu.memory_space<vmem>>, vector<1x8x1xf32>,
    %c0_i32_148 = arith.constant 0 : i32
    %163 = arith.cmpi eq, %arg2, %c0_i32_148 : i32
    %164 = arith.extui %163 : i1 to i32
    %c0_i32_149 = arith.constant 0 : i32
    %165 = arith.cmpi ne, %164, %c0_i32_149 : i32
    scf.if %165 {
      %c0_150 = arith.constant 0 : index
      %c0_151 = arith.constant 0 : index
      %c0_152 = arith.constant 0 : index
      %166 = vector.load %arg8[%c0_150, %c0_151, %c0_152] : memref<4x8x1xf32, #tpu.memory_space<vmem>>, vector<1x8x1xf32>
      %167 = vector.shape_cast %166 : vector<1x8x1xf32> to vector<8x1xf32>
      %168 = tpu.reciprocal %167 {approx = true} : vector<8x1xf32> -> vector<8x1xf32>
      %169 = arith.mulf %167, %168 : vector<8x1xf32>
      %cst_153 = arith.constant 2.000000e+00 : f32
      %170 = vector.broadcast %cst_153 : f32 to vector<8x1xf32>
      %171 = arith.subf %170, %169 : vector<8x1xf32>
      %172 = arith.mulf %168, %171 : vector<8x1xf32>
      %c0_154 = arith.constant 0 : index
      %c0_155 = arith.constant 0 : index
      %c0_156 = arith.constant 0 : index
      %173 = vector.load %arg9[%c0_154, %c0_155, %c0_156] : memref<4x8x8xf32, #tpu.memory_space<vmem>>, vector<1x8x8xf32>
      %174 = vector.shape_cast %173 : vector<1x8x8xf32> to vector<8x8xf32>
      %175 = vector.broadcast %172 : vector<8x1xf32> to vector<8x8xf32>
      %176 = arith.mulf %174, %175 : vector<8x8xf32>
      %c0_157 = arith.constant 0 : index
      %c0_158 = arith.constant 0 : index
      %c0_159 = arith.constant 0 : index
      %177 = vector.load %arg6[%c0_157, %c0_158, %c0_159] : memref<1x8x32xf32, #tpu.memory_space<vmem>>, vector<1x8x8xf32>
      %178 = vector.shape_cast %177 : vector<1x8x8xf32> to vector<8x8xf32>
      %179 = vector.shape_cast %176 : vector<8x8xf32> to vector<1x8x8xf32>
      tpu.vector_store %arg6[%c0_157, %c0_158, %c0_159], %179 {strides = array<i32>} : memref<1x8x32xf32, #tpu.memory_space<vmem>>, vector<1x8x8xf32>,
      %c1_160 = arith.constant 1 : index
      %c0_161 = arith.constant 0 : index
      %c0_162 = arith.constant 0 : index
      %180 = vector.load %arg8[%c1_160, %c0_161, %c0_162] : memref<4x8x1xf32, #tpu.memory_space<vmem>>, vector<1x8x1xf32>
      %181 = vector.shape_cast %180 : vector<1x8x1xf32> to vector<8x1xf32>
      %182 = tpu.reciprocal %181 {approx = true} : vector<8x1xf32> -> vector<8x1xf32>
      %183 = arith.mulf %181, %182 : vector<8x1xf32>
      %cst_163 = arith.constant 2.000000e+00 : f32
      %184 = vector.broadcast %cst_163 : f32 to vector<8x1xf32>
      %185 = arith.subf %184, %183 : vector<8x1xf32>
      %186 = arith.mulf %182, %185 : vector<8x1xf32>
      %c1_164 = arith.constant 1 : index
      %c0_165 = arith.constant 0 : index
      %c0_166 = arith.constant 0 : index
      %187 = vector.load %arg9[%c1_164, %c0_165, %c0_166] : memref<4x8x8xf32, #tpu.memory_space<vmem>>, vector<1x8x8xf32>
      %188 = vector.shape_cast %187 : vector<1x8x8xf32> to vector<8x8xf32>
      %189 = vector.broadcast %186 : vector<8x1xf32> to vector<8x8xf32>
      %190 = arith.mulf %188, %189 : vector<8x8xf32>
      %c0_167 = arith.constant 0 : index
      %c0_168 = arith.constant 0 : index
      %c8 = arith.constant 8 : index
      %191 = vector.load %arg6[%c0_167, %c0_168, %c8] : memref<1x8x32xf32, #tpu.memory_space<vmem>>, vector<1x8x8xf32>
      %192 = vector.shape_cast %191 : vector<1x8x8xf32> to vector<8x8xf32>
      %193 = vector.shape_cast %190 : vector<8x8xf32> to vector<1x8x8xf32>
      tpu.vector_store %arg6[%c0_167, %c0_168, %c8], %193 {strides = array<i32>} : memref<1x8x32xf32, #tpu.memory_space<vmem>>, vector<1x8x8xf32>,
      %c2_169 = arith.constant 2 : index
      %c0_170 = arith.constant 0 : index
      %c0_171 = arith.constant 0 : index
      %194 = vector.load %arg8[%c2_169, %c0_170, %c0_171] : memref<4x8x1xf32, #tpu.memory_space<vmem>>, vector<1x8x1xf32>
      %195 = vector.shape_cast %194 : vector<1x8x1xf32> to vector<8x1xf32>
      %196 = tpu.reciprocal %195 {approx = true} : vector<8x1xf32> -> vector<8x1xf32>
      %197 = arith.mulf %195, %196 : vector<8x1xf32>
      %cst_172 = arith.constant 2.000000e+00 : f32
      %198 = vector.broadcast %cst_172 : f32 to vector<8x1xf32>
      %199 = arith.subf %198, %197 : vector<8x1xf32>
      %200 = arith.mulf %196, %199 : vector<8x1xf32>
      %c2_173 = arith.constant 2 : index
      %c0_174 = arith.constant 0 : index
      %c0_175 = arith.constant 0 : index
      %201 = vector.load %arg9[%c2_173, %c0_174, %c0_175] : memref<4x8x8xf32, #tpu.memory_space<vmem>>, vector<1x8x8xf32>
      %202 = vector.shape_cast %201 : vector<1x8x8xf32> to vector<8x8xf32>
      %203 = vector.broadcast %200 : vector<8x1xf32> to vector<8x8xf32>
      %204 = arith.mulf %202, %203 : vector<8x8xf32>
      %c0_176 = arith.constant 0 : index
      %c0_177 = arith.constant 0 : index
      %c16 = arith.constant 16 : index
      %205 = vector.load %arg6[%c0_176, %c0_177, %c16] : memref<1x8x32xf32, #tpu.memory_space<vmem>>, vector<1x8x8xf32>
      %206 = vector.shape_cast %205 : vector<1x8x8xf32> to vector<8x8xf32>
      %207 = vector.shape_cast %204 : vector<8x8xf32> to vector<1x8x8xf32>
      tpu.vector_store %arg6[%c0_176, %c0_177, %c16], %207 {strides = array<i32>} : memref<1x8x32xf32, #tpu.memory_space<vmem>>, vector<1x8x8xf32>,
      %c3_178 = arith.constant 3 : index
      %c0_179 = arith.constant 0 : index
      %c0_180 = arith.constant 0 : index
      %208 = vector.load %arg8[%c3_178, %c0_179, %c0_180] : memref<4x8x1xf32, #tpu.memory_space<vmem>>, vector<1x8x1xf32>
      %209 = vector.shape_cast %208 : vector<1x8x1xf32> to vector<8x1xf32>
      %210 = tpu.reciprocal %209 {approx = true} : vector<8x1xf32> -> vector<8x1xf32>
      %211 = arith.mulf %209, %210 : vector<8x1xf32>
      %cst_181 = arith.constant 2.000000e+00 : f32
      %212 = vector.broadcast %cst_181 : f32 to vector<8x1xf32>
      %213 = arith.subf %212, %211 : vector<8x1xf32>
      %214 = arith.mulf %210, %213 : vector<8x1xf32>
      %c3_182 = arith.constant 3 : index
      %c0_183 = arith.constant 0 : index
      %c0_184 = arith.constant 0 : index
      %215 = vector.load %arg9[%c3_182, %c0_183, %c0_184] : memref<4x8x8xf32, #tpu.memory_space<vmem>>, vector<1x8x8xf32>
      %216 = vector.shape_cast %215 : vector<1x8x8xf32> to vector<8x8xf32>
      %217 = vector.broadcast %214 : vector<8x1xf32> to vector<8x8xf32>
      %218 = arith.mulf %216, %217 : vector<8x8xf32>
      %c0_185 = arith.constant 0 : index
      %c0_186 = arith.constant 0 : index
      %c24 = arith.constant 24 : index
      %219 = vector.load %arg6[%c0_185, %c0_186, %c24] : memref<1x8x32xf32, #tpu.memory_space<vmem>>, vector<1x8x8xf32>
      %220 = vector.shape_cast %219 : vector<1x8x8xf32> to vector<8x8xf32>
      %221 = vector.shape_cast %218 : vector<8x8xf32> to vector<1x8x8xf32>
      tpu.vector_store %arg6[%c0_185, %c0_186, %c24], %221 {strides = array<i32>} : memref<1x8x32xf32, #tpu.memory_space<vmem>>, vector<1x8x8xf32>,
    } else {
    }
    return
  }
  func.func @transform_0(%arg0: i32, %arg1: i32, %arg2: i32) -> (i32, i32, i32, i32, i32) {
    %c0_i32 = arith.constant 0 : i32
    %c0_i32_0 = arith.constant 0 : i32
    %c0_i32_1 = arith.constant 0 : i32
    %c0_i32_2 = arith.constant 0 : i32
    return %c0_i32, %arg0, %c0_i32_0, %arg1, %c0_i32_1 : i32, i32, i32, i32, i32
  }
  func.func @transform_1(%arg0: i32, %arg1: i32, %arg2: i32) -> (i32, i32, i32, i32, i32) {
    %c1_i32 = arith.constant 1 : i32
    %c0_i32 = arith.constant 0 : i32
    %c0_i32_0 = arith.constant 0 : i32
    %c0_i32_1 = arith.constant 0 : i32
    return %c1_i32, %arg0, %c0_i32, %arg2, %c0_i32_0 : i32, i32, i32, i32, i32
  }
  func.func @transform_2(%arg0: i32, %arg1: i32, %arg2: i32) -> (i32, i32, i32, i32, i32) {
    %c2_i32 = arith.constant 2 : i32
    %c0_i32 = arith.constant 0 : i32
    %c0_i32_0 = arith.constant 0 : i32
    %c0_i32_1 = arith.constant 0 : i32
    return %c2_i32, %arg0, %c0_i32, %arg2, %c0_i32_0 : i32, i32, i32, i32, i32
  }
  func.func @transform_3(%arg0: i32, %arg1: i32, %arg2: i32) -> (i32, i32, i32) {
    %c0_i32 = arith.constant 0 : i32
    %c0_i32_0 = arith.constant 0 : i32
    return %arg0, %arg1, %c0_i32 : i32, i32, i32
  }
}

</mosaic_0001>

<llo_original>
// kernel: attention_forward.5
$region0: #{attention_forward.5}
  #allocation0 [shape = 'u32[]', space=smem, size = 0x4, offset = 0x4, fixed_abs, tag = 'smem constant byte address 0x4 - core index']
  #allocation1 [shape = 'u32[144,128]{1,0:T(1,128)}', space=vmem, size = 0x12000, scoped, tag = 'internal scratch']
  #allocation2 [shape = 'f32[16,32]{1,0:T(8,128)}', space=vmem, size = 0x2000, scoped, tag = 'scratch operand']
  %s0 = inlined_call_operand.vmem [shape: f32[16,32], index: 0, kind: input, shape index: {}]
  %s1 = inlined_call_operand.vmem [shape: f32[32,32], index: 1, kind: input, shape index: {}]
  %s2 = inlined_call_operand.vmem [shape: f32[1,32], index: 2, kind: input, shape index: {}]
  %s3 = inlined_call_operand.hbm [shape: f32[16,32], index: 3, kind: output, shape index: {}]
  %s4 = sld [smem:[#allocation0]]
  $region30: #{attention_forward.5} parent=0
    _
  %s6 = ssub.s32 1, %s4
  %s7 = scalar_select 0, %s6, %s4
  $region1: #{attention_forward.5} parent=0
    #allocation3 [shape = 'u8[8192]{0}', space=vmem, size = 0x2000, scoped, tag = 'output window, operand 0, single buffered']
    #allocation4 [shape = 's32[1]{0}', space=sflag, size = 0x4, scoped, tag = 'scoped memory for attention_forward.5']
    %8 = vsyncpa [#allocation4], 0
    // Predicated region
    $region2: #{attention_forward.5} parent=1 // pred_check
      _
    $region3: #{attention_forward.5} parent=1 // pred_check_branch
      %10 = sbr.rel (0) target = $region5
    $region4: #{attention_forward.5} parent=1 // pred_region
      _
    $region5: #{attention_forward.5} parent=1 // pred_fallthru
      _
    // Predicated region
    $region6: #{attention_forward.5} parent=1 // pred_check
      _
    $region7: #{attention_forward.5} parent=1 // pred_check_branch
      %12 = sbr.rel (0) target = $region9
    $region8: #{attention_forward.5} parent=1 // pred_region
      _
    $region9: #{attention_forward.5} parent=1 // pred_fallthru
      _
    // Predicated region
    $region10: #{attention_forward.5} parent=1 // pred_check
      _
    $region11: #{attention_forward.5} parent=1 // pred_check_branch
      %14 = sbr.rel (0) target = $region13
    $region12: #{attention_forward.5} parent=1 // pred_region
      _
    $region13: #{attention_forward.5} parent=1 // pred_fallthru
      _
    %p15 = scmp.eq.s32.totalorder 0, 0
    // Predicated region
    $region14: #{attention_forward.5} parent=1 // pred_check
      %p16 = pneg %p15
    $region15: #{attention_forward.5} parent=1 // pred_check_branch
      %18 = sbr.rel (%p16) target = $region17
    $region16: #{attention_forward.5} parent=1 // pred_region
      %vm19 = vcmask 261120
      %20 = vst.msk [vmem:[#allocation2] sm:$0xff] %vm19, 0.0
      %21 = vst.msk [vmem:[#allocation2 + $0x8] sm:$0xff] %vm19, 0.0
    $region17: #{attention_forward.5} parent=1 // pred_fallthru
      _
    %v22 = vld [vmem:[#allocation2] sm:$0xff]
    %v23 = vld [vmem:[#allocation2 + $0x8] sm:$0xff]
    %v24 = vld [vmem:[%s0] sm:$0xff]
    %v25 = vld [vmem:[%s0 + $0x8] sm:$0xff]
    %v26 = vld [vmem:[%s1] sm:$0xff]
    %v27 = vld [vmem:[%s1 + $0x8] sm:$0xff]
    %v28 = vld [vmem:[%s1 + $0x10] sm:$0xff]
    %v29 = vld [vmem:[%s1 + $0x18] sm:$0xff]
    %vm30 = vcmask 261120
    %v32 = vsel %vm30, %v24, 0
    %v35 = vsel %vm30, %v25, 0
    %37 = vmatprep.subr.mxu0 0.0
    %38 = vmatpush1.msra.mxu0 %v26
    %39 = vmatprep.subr.mxu0 0.0
    %40 = vmatpush1.msra.mxu0 %v27
    %41 = vmatprep.subr.mxu0 0.0
    %42 = vmatpush1.msra.mxu0 %v28
    %43 = vmatprep.subr.mxu0 0.0
    %44 = vmatpush1.msra.mxu0 %v29
    %45 = vmatprep.subr.mxu0 0.0
    %46 = vmatpush1.msra.mxu0 0.0
    %47 = vmatprep.subr.mxu0 0.0
    %48 = vmatpush1.msra.mxu0 0.0
    %49 = vmatprep.subr.mxu0 0.0
    %50 = vmatpush1.msra.mxu0 0.0
    %51 = vmatprep.subr.mxu0 0.0
    %52 = vmatpush1.msra.mxu0 0.0
    %53 = vmatprep.subr.mxu0 0.0
    %54 = vmatpush1.msra.mxu0 0.0
    %55 = vmatprep.subr.mxu0 0.0
    %56 = vmatpush1.msra.mxu0 0.0
    %57 = vmatprep.subr.mxu0 0.0
    %58 = vmatpush1.msra.mxu0 0.0
    %59 = vmatprep.subr.mxu0 0.0
    %60 = vmatpush1.msra.mxu0 0.0
    %61 = vmatprep.subr.mxu0 0.0
    %62 = vmatpush1.msra.mxu0 0.0
    %63 = vmatprep.subr.mxu0 0.0
    %64 = vmatpush1.msra.mxu0 0.0
    %65 = vmatprep.subr.mxu0 0.0
    %66 = vmatpush1.msra.mxu0 0.0
    %67 = vmatprep.subr.mxu0 0.0
    %68 = vmatpush1.msra.mxu0 0.0
    %69 = vmatprep.subr.mxu0 0.0
    %70 = vmatpush1.msra.mxu0 0.0
    %71 = vmatprep.subr.mxu0 0.0
    %72 = vmatpush1.msra.mxu0 0.0
    %73 = vmatprep.subr.mxu0 0.0
    %74 = vmatpush1.msra.mxu0 0.0
    %75 = vmatprep.subr.mxu0 0.0
    %76 = vmatpush1.msra.mxu0 0.0
    %77 = vmatprep.subr.mxu0 0.0
    %78 = vmatpush1.msra.mxu0 0.0
    %79 = vmatprep.subr.mxu0 0.0
    %80 = vmatpush1.msra.mxu0 0.0
    %81 = vmatprep.subr.mxu0 0.0
    %82 = vmatpush1.msra.mxu0 0.0
    %83 = vmatprep.subr.mxu0 0.0
    %84 = vmatpush1.msra.mxu0 0.0
    %85 = vmatprep.subr.mxu0 0.0
    %86 = vmatpush1.msra.mxu0 0.0
    %87 = vmatprep.subr.mxu0 0.0
    %88 = vmatpush1.msra.mxu0 0.0
    %89 = vmatprep.subr.mxu0 0.0
    %90 = vmatpush1.msra.mxu0 0.0
    %91 = vmatprep.subr.mxu0 0.0
    %92 = vmatpush1.msra.mxu0 0.0
    %93 = vmatprep.subr.mxu0 0.0
    %94 = vmatpush1.msra.mxu0 0.0
    %95 = vmatprep.subr.mxu0 0.0
    %96 = vmatpush1.msra.mxu0 0.0
    %97 = vmatprep.subr.mxu0 0.0
    %98 = vmatpush1.msra.mxu0 0.0
    %99 = vmatprep.subr.mxu0 0.0
    %100 = vmatpush1.msra.mxu0 0.0
    %101 = vmatprep.mubr.f32.mxu0 0.0
    %102 = vmatmul.mubr.f32.gmra.mrb[0].mxu0 %v32
    %v103 = vpop.f32.mrb[0].mxu0
    %v104 = vadd.f32 0.0, %v103
    %v105 = vpop.f32.mrb[0].mxu0
    %106 = vmatprep.mubr.f32.mxu0 0.0
    %107 = vmatmul.mubr.f32.gmra.mrb[0].mxu0 %v35
    %v108 = vpop.f32.mrb[0].mxu0
    %v109 = vadd.f32 0.0, %v108
    %v110 = vpop.f32.mrb[0].mxu0
    %111 = vdwg.mxu0
    %v112 = vadd.f32 %v22, %v104
    %v113 = vadd.f32 %v23, %v109
    %114 = vst.msk [vmem:[#allocation2] sm:$0xff] %vm30, %v112
    %115 = vst.msk [vmem:[#allocation2 + $0x8] sm:$0xff] %vm30, %v113
    // Predicated region
    $region18: #{attention_forward.5} parent=1 // pred_check
      %p116 = pneg %p15
    $region19: #{attention_forward.5} parent=1 // pred_check_branch
      %118 = sbr.rel (%p116) target = $region21
    $region20: #{attention_forward.5} parent=1 // pred_region
      %v119 = vld [vmem:[#allocation2] sm:$0xff]
      %v120 = vld [vmem:[#allocation2 + $0x8] sm:$0xff]
      %v121 = vld [vmem:[%s2] sm:$0x1]
      %v123 = vlaneseq
      %v124 = vshrl.u32 %v123, 7
      %v125 = vsub.s32 0, %v124
      %v126 = vrot.slane %v121, %v125
      %v128 = vadd.f32 %v119, %v126
      %v129 = vadd.f32 %v120, %v126
      %130 = vst.msk [vmem:[#allocation3] sm:$0xff] %vm30, %v128
      %131 = vst.msk [vmem:[#allocation3 + $0x8] sm:$0xff] %vm30, %v129
    $region21: #{attention_forward.5} parent=1 // pred_fallthru
      _
    // Predicated region
    $region22: #{attention_forward.5} parent=1 // pred_check
      _
    $region23: #{attention_forward.5} parent=1 // pred_check_branch
      %133 = sbr.rel (0) target = $region25
    $region24: #{attention_forward.5} parent=1 // pred_region
      %s135 = ssub.s32 256, 256
      %136 = vsyncadd [#allocation4], %s135
      %s137 = sshll.u32 [#allocation3], 4
      %s138 = int_to_ptr.vmem [resolvable:$true] %s137
      %143 = dma.vmem_to_hbm [thread:$0]  %s138, 256, %s3, [#allocation4], 128, 128, 8
    $region25: #{attention_forward.5} parent=1 // pred_fallthru
      _
    // Predicated region
    $region26: #{attention_forward.5} parent=1 // pred_check
      _
    $region27: #{attention_forward.5} parent=1 // pred_check_branch
      %145 = sbr.rel (0) target = $region29
    $region28: #{attention_forward.5} parent=1 // pred_region
      %146 = dma.done [#allocation4], 256
    $region29: #{attention_forward.5} parent=1 // pred_fallthru
      _
    %147 = vsyncpa [#allocation4], 1

// kernel: attention_forward.3
$region0: #{attention_forward.3}
  #allocation0 [shape = 'u32[]', space=smem, size = 0x4, offset = 0x4, fixed_abs, tag = 'smem constant byte address 0x4 - core index']
  #allocation1 [shape = 'u32[144,128]{1,0:T(1,128)}', space=vmem, size = 0x12000, scoped, tag = 'internal scratch']
  %s0 = inlined_call_operand.vmem [shape: f32[2,8,32], index: 0, kind: input, shape index: {}]
  %s1 = inlined_call_operand.vmem [shape: f32[3,4,32,8], index: 1, kind: input, shape index: {}]
  %s2 = inlined_call_operand.vmem [shape: f32[3,4,1,8], index: 2, kind: input, shape index: {}]
  %s3 = inlined_call_operand.vmem [shape: f32[3,2,4,8,8], index: 3, kind: output, shape index: {}]
  %s4 = sld [smem:[#allocation0]]
  $region45: #{attention_forward.3} parent=0
    _
  %s6 = ssub.s32 1, %s4
  %s7 = scalar_select 0, %s6, %s4
  loop: start=0, step=1, limit=26
  $region2: #{attention_forward.3} parent=0 // loop_pre_header
    _
  $region3: #{attention_forward.3} parent=0 // loop_header
    %s9 = sphi 0, %s13
    %p10 = scmp.ge.s32.totalorder %s9, 26
    %s16 = sphi 0, %s42
    %s17 = sphi 0, %s38
    %s18 = sphi 0, %s34
    %s19 = sphi 0, %s30
    %s20 = sphi 0, %s16
    %s21 = sphi 0, %s17
    %s22 = sphi 0, %s18
    %s23 = sphi 0, %s19
    %s24 = sphi 0, %s20
    %s25 = sphi 0, %s21
    %s26 = sphi 0, %s22
    %s27 = sphi 0, %s23
    %s47 = sphi 0, %s49
    %s50 = sphi 0, %s47
    %s51 = sphi 0, %s50
    %s67 = sphi 0, %s51
    %s75 = sphi 0, %s77
    %s78 = sphi 0, %s75
    %s79 = sphi 0, %s78
    %s95 = sphi 0, %s79
    %s103 = sphi 0, %s105
    %s106 = sphi 0, %s103
    %s107 = sphi 0, %s106
    %s123 = sphi 0, %s107
    %s135 = sphi 0, %s137
    %s138 = sphi 0, %s135
    %s139 = sphi 0, %s138
    %s155 = sphi 0, %s139
  $region4: #{attention_forward.3} parent=0 // loop_header_branch
    %12 = sbr.rel (%p10) target = $region8
  $region5: #{attention_forward.3} parent=0 // loop_body
    %s14 = ssub.s32 %s9, 1
    %s15 = ssub.s32 %s9, 2
    %s28 = sadd.s32 1, %s19
    %p29 = scmp.ge.s32.totalorder %s28, 4
    %s30 = scalar_select %p29, 0, %s28
    %s31 = sadd.s32 1, %s18
    %s32 = scalar_select %p29, %s31, %s18
    %p33 = scmp.ge.s32.totalorder %s32, 3
    %s34 = scalar_select %p33, 0, %s32
    %s35 = sadd.s32 1, %s17
    %s36 = scalar_select %p33, %s35, %s17
    %p37 = scmp.ge.s32.totalorder %s36, 1
    %s38 = scalar_select %p37, 0, %s36
    %s39 = sadd.s32 1, %s16
    %s40 = scalar_select %p37, %s39, %s16
    %p41 = scmp.ge.s32.totalorder %s40, 2
    %s42 = scalar_select %p41, 0, %s40
    %s43 = ssub.s32 %s16, %s42
    %s44 = ssub.s32 %s17, %s38
    %s45 = sor.u32 %s43, %s44
    %p46 = scmp.eq.s32.totalorder %s45, 0
    %s48 = sadd.s32 %s47, 1
    %s49 = scalar_select %p46, %s47, %s48
    %p52 = pneg %p46
    %p53 = scmp.eq.s32.totalorder %s9, 23
    %p54 = por %p52, %p53
    %p55 = scmp.ne.s32.totalorder %s47, %s50
    %p56 = scmp.eq.s32.totalorder %s9, 0
    %p57 = por %p55, %p56
    %p58 = scmp.ne.s32.totalorder %s47, %s50
    %p59 = scmp.eq.s32.totalorder %s14, 23
    %p60 = por %p58, %p59
    %p61 = scmp.ne.s32.totalorder %s50, %s51
    %p62 = scmp.eq.s32.totalorder %s14, 0
    %p63 = por %p61, %p62
    %p64 = scmp.ne.s32.totalorder %s50, %s51
    %p65 = scmp.eq.s32.totalorder %s15, 23
    %p66 = por %p64, %p65
    %p68 = scmp.ne.s32.totalorder %s51, %s67
    %p69 = scmp.eq.s32.totalorder %s15, 0
    %p70 = por %p68, %p69
    %s71 = ssub.s32 %s18, %s34
    %s72 = ssub.s32 %s19, %s30
    %s73 = sor.u32 %s71, %s72
    %p74 = scmp.eq.s32.totalorder %s73, 0
    %s76 = sadd.s32 %s75, 1
    %s77 = scalar_select %p74, %s75, %s76
    %p80 = pneg %p74
    %p81 = scmp.eq.s32.totalorder %s9, 23
    %p82 = por %p80, %p81
    %p83 = scmp.ne.s32.totalorder %s75, %s78
    %p84 = scmp.eq.s32.totalorder %s9, 0
    %p85 = por %p83, %p84
    %p86 = scmp.ne.s32.totalorder %s75, %s78
    %p87 = scmp.eq.s32.totalorder %s14, 23
    %p88 = por %p86, %p87
    %p89 = scmp.ne.s32.totalorder %s78, %s79
    %p90 = scmp.eq.s32.totalorder %s14, 0
    %p91 = por %p89, %p90
    %p92 = scmp.ne.s32.totalorder %s78, %s79
    %p93 = scmp.eq.s32.totalorder %s15, 23
    %p94 = por %p92, %p93
    %p96 = scmp.ne.s32.totalorder %s79, %s95
    %p97 = scmp.eq.s32.totalorder %s15, 0
    %p98 = por %p96, %p97
    %s99 = ssub.s32 %s18, %s34
    %s100 = ssub.s32 %s19, %s30
    %s101 = sor.u32 %s99, %s100
    %p102 = scmp.eq.s32.totalorder %s101, 0
    %s104 = sadd.s32 %s103, 1
    %s105 = scalar_select %p102, %s103, %s104
    %p108 = pneg %p102
    %p109 = scmp.eq.s32.totalorder %s9, 23
    %p110 = por %p108, %p109
    %p111 = scmp.ne.s32.totalorder %s103, %s106
    %p112 = scmp.eq.s32.totalorder %s9, 0
    %p113 = por %p111, %p112
    %p114 = scmp.ne.s32.totalorder %s103, %s106
    %p115 = scmp.eq.s32.totalorder %s14, 23
    %p116 = por %p114, %p115
    %p117 = scmp.ne.s32.totalorder %s106, %s107
    %p118 = scmp.eq.s32.totalorder %s14, 0
    %p119 = por %p117, %p118
    %p120 = scmp.ne.s32.totalorder %s106, %s107
    %p121 = scmp.eq.s32.totalorder %s15, 23
    %p122 = por %p120, %p121
    %p124 = scmp.ne.s32.totalorder %s107, %s123
    %p125 = scmp.eq.s32.totalorder %s15, 0
    %p126 = por %p124, %p125
    %s127 = ssub.s32 %s18, %s34
    %s128 = ssub.s32 %s16, %s42
    %s129 = sor.u32 %s127, %s128
    %s130 = ssub.s32 %s19, %s30
    %s131 = sor.u32 %s129, %s130
    %s132 = ssub.s32 %s17, %s38
    %s133 = sor.u32 %s131, %s132
    %p134 = scmp.eq.s32.totalorder %s133, 0
    %s136 = sadd.s32 %s135, 1
    %s137 = scalar_select %p134, %s135, %s136
    %p140 = pneg %p134
    %p141 = scmp.eq.s32.totalorder %s9, 23
    %p142 = por %p140, %p141
    %p143 = scmp.ne.s32.totalorder %s135, %s138
    %p144 = scmp.eq.s32.totalorder %s9, 0
    %p145 = por %p143, %p144
    %p146 = scmp.ne.s32.totalorder %s135, %s138
    %p147 = scmp.eq.s32.totalorder %s14, 23
    %p148 = por %p146, %p147
    %p149 = scmp.ne.s32.totalorder %s138, %s139
    %p150 = scmp.eq.s32.totalorder %s14, 0
    %p151 = por %p149, %p150
    %p152 = scmp.ne.s32.totalorder %s138, %s139
    %p153 = scmp.eq.s32.totalorder %s15, 23
    %p154 = por %p152, %p153
    %p156 = scmp.ne.s32.totalorder %s139, %s155
    %p157 = scmp.eq.s32.totalorder %s15, 0
    %p158 = por %p156, %p157
    %p159 = scmp.le.s32.totalorder 1, %s9
    %p160 = scmp.lt.s32.totalorder %s9, 25
    %p161 = pnand %p159, %p160
    %p162 = pneg %p161
    // Predicated region
    $region9: #{attention_forward.3} parent=5 // pred_check
      _
    $region10: #{attention_forward.3} parent=5 // pred_check_branch
      %164 = sbr.rel (%p161) target = $region12
    $region11: #{attention_forward.3} parent=5 // pred_region
      %s165 = ssub.s32 %s9, 1
    $region12: #{attention_forward.3} parent=5 // pred_fallthru
      _
    %p166 = scmp.lt.s32.totalorder %s9, 24
    // Predicated region
    $region13: #{attention_forward.3} parent=5 // pred_check
      %p167 = pneg %p166
    $region14: #{attention_forward.3} parent=5 // pred_check_branch
      %169 = sbr.rel (%p167) target = $region16
    $region15: #{attention_forward.3} parent=5 // pred_region
      // Predicated region
      $region17: #{attention_forward.3} parent=15 // pred_check
        %p170 = pneg %p57
      $region18: #{attention_forward.3} parent=15 // pred_check_branch
        %172 = sbr.rel (%p170) target = $region20
      $region19: #{attention_forward.3} parent=15 // pred_region
        %p173 = scmp.lt.s32.totalorder %s16, 1
        %s174 = scalar_select %p173, %s16, 1
        %p175 = scmp.lt.s32.totalorder %s17, 0
        %s176 = scalar_select %p175, %s17, 0
        %s177 = sadd.s32 %s176, %s174
        %s178 = smul.addr %s177, 8
        %s179 = scalar_lea.vmem %s0, %s178
      $region20: #{attention_forward.3} parent=15 // pred_fallthru
        _
      // Predicated region
      $region21: #{attention_forward.3} parent=15 // pred_check
        %p180 = pneg %p85
      $region22: #{attention_forward.3} parent=15 // pred_check_branch
        %182 = sbr.rel (%p180) target = $region24
      $region23: #{attention_forward.3} parent=15 // pred_region
        %p183 = scmp.lt.s32.totalorder %s18, 2
        %s184 = scalar_select %p183, %s18, 2
        %p185 = scmp.lt.s32.totalorder %s19, 3
        %s186 = scalar_select %p185, %s19, 3
        %s187 = smul.addr %s186, 4
        %s188 = smul.addr %s184, 16
        %s189 = sadd.s32 %s187, %s188
        %s190 = smul.addr %s189, 8
        %s191 = scalar_lea.vmem %s1, %s190
      $region24: #{attention_forward.3} parent=15 // pred_fallthru
        _
      // Predicated region
      $region25: #{attention_forward.3} parent=15 // pred_check
        %p192 = pneg %p113
      $region26: #{attention_forward.3} parent=15 // pred_check_branch
        %194 = sbr.rel (%p192) target = $region28
      $region27: #{attention_forward.3} parent=15 // pred_region
        %p195 = scmp.lt.s32.totalorder %s18, 2
        %s196 = scalar_select %p195, %s18, 2
        %p197 = scmp.lt.s32.totalorder %s19, 3
        %s198 = scalar_select %p197, %s19, 3
        %s199 = smul.addr %s196, 4
        %s200 = sadd.s32 %s198, %s199
        %s201 = scalar_lea.vmem %s2, %s200
      $region28: #{attention_forward.3} parent=15 // pred_fallthru
        _
    $region16: #{attention_forward.3} parent=5 // pred_fallthru
      _
    %p202 = scmp.le.s32.totalorder 1, %s9
    %p203 = scmp.lt.s32.totalorder %s9, 25
    %p204 = pnand %p202, %p203
    %p205 = pneg %p204
    // Predicated region
    $region29: #{attention_forward.3} parent=5 // pred_check
      _
    $region30: #{attention_forward.3} parent=5 // pred_check_branch
      %207 = sbr.rel (%p204) target = $region32
    $region31: #{attention_forward.3} parent=5 // pred_region
      %s208 = ssub.s32 %s9, 1
      %p209 = scmp.lt.s32.totalorder %s20, 1
      %s210 = scalar_select %p209, %s20, 1
      %p211 = scmp.lt.s32.totalorder %s21, 0
      %s212 = scalar_select %p211, %s21, 0
      %s213 = sadd.s32 %s212, %s210
      %s214 = smul.addr %s213, 8
      %s215 = scalar_lea.vmem %s0, %s214
      %p216 = pneg %p63
      %p217 = pneg %p60
      %p218 = scmp.lt.s32.totalorder %s22, 2
      %s219 = scalar_select %p218, %s22, 2
      %p220 = scmp.lt.s32.totalorder %s23, 3
      %s221 = scalar_select %p220, %s23, 3
      %s222 = smul.addr %s221, 4
      %s223 = smul.addr %s219, 16
      %s224 = sadd.s32 %s222, %s223
      %s225 = smul.addr %s224, 8
      %s226 = scalar_lea.vmem %s1, %s225
      %p227 = pneg %p91
      %p228 = pneg %p88
      %p229 = scmp.lt.s32.totalorder %s22, 2
      %s230 = scalar_select %p229, %s22, 2
      %p231 = scmp.lt.s32.totalorder %s23, 3
      %s232 = scalar_select %p231, %s23, 3
      %s233 = smul.addr %s230, 4
      %s234 = sadd.s32 %s232, %s233
      %s235 = scalar_lea.vmem %s2, %s234
      %p236 = pneg %p119
      %p237 = pneg %p116
      %p238 = pneg %p151
      %p239 = pneg %p148
      %p240 = scmp.lt.s32.totalorder %s22, 2
      %s241 = scalar_select %p240, %s22, 2
      %p242 = scmp.lt.s32.totalorder %s20, 1
      %s243 = scalar_select %p242, %s20, 1
      %p244 = scmp.lt.s32.totalorder %s23, 3
      %s245 = scalar_select %p244, %s23, 3
      %p246 = scmp.lt.s32.totalorder %s21, 0
      %s247 = scalar_select %p246, %s21, 0
      %s248 = sadd.s32 %s247, %s245
      %s249 = smul.addr %s243, 4
      %s250 = sadd.s32 %s248, %s249
      %s251 = smul.addr %s241, 8
      %s252 = sadd.s32 %s250, %s251
      %s253 = smul.addr %s252, 8
      %s254 = scalar_lea.vmem %s3, %s253
      %p255 = scmp.lt.s32.totalorder %s20, 1
      %s256 = scalar_select %p255, %s20, 1
      %p257 = scmp.lt.s32.totalorder %s21, 0
      %s258 = scalar_select %p257, %s21, 0
      %s259 = sadd.s32 %s258, %s256
      %s260 = smul.addr %s259, 8
      %s261 = scalar_lea.vmem %s0, %s260
      %p262 = scmp.lt.s32.totalorder %s22, 2
      %s263 = scalar_select %p262, %s22, 2
      %p264 = scmp.lt.s32.totalorder %s23, 3
      %s265 = scalar_select %p264, %s23, 3
      %s266 = smul.addr %s265, 4
      %s267 = smul.addr %s263, 16
      %s268 = sadd.s32 %s266, %s267
      %s269 = smul.addr %s268, 8
      %s270 = scalar_lea.vmem %s1, %s269
      %p271 = scmp.lt.s32.totalorder %s22, 2
      %s272 = scalar_select %p271, %s22, 2
      %p273 = scmp.lt.s32.totalorder %s23, 3
      %s274 = scalar_select %p273, %s23, 3
      %s275 = smul.addr %s272, 4
      %s276 = sadd.s32 %s274, %s275
      %s277 = scalar_lea.vmem %s2, %s276
      %p278 = scmp.lt.s32.totalorder %s22, 2
      %s279 = scalar_select %p278, %s22, 2
      %p280 = scmp.lt.s32.totalorder %s20, 1
      %s281 = scalar_select %p280, %s20, 1
      %p282 = scmp.lt.s32.totalorder %s23, 3
      %s283 = scalar_select %p282, %s23, 3
      %p284 = scmp.lt.s32.totalorder %s21, 0
      %s285 = scalar_select %p284, %s21, 0
      %s286 = sadd.s32 %s285, %s283
      %s287 = smul.addr %s281, 4
      %s288 = sadd.s32 %s286, %s287
      %s289 = smul.addr %s279, 8
      %s290 = sadd.s32 %s288, %s289
      %s291 = smul.addr %s290, 8
      %s292 = scalar_lea.vmem %s3, %s291
      %v293 = vld [vmem:[%s261] sm:$0xff]
      %v294 = vld [vmem:[%s270] sm:$0xff]
      %v295 = vld [vmem:[%s270 + $0x8] sm:$0xff]
      %v296 = vld [vmem:[%s270 + $0x10] sm:$0xff]
      %v297 = vld [vmem:[%s270 + $0x18] sm:$0xff]
      %v298 = vld [vmem:[%s277] sm:$0x1]
      %v300 = vlaneseq
      %v301 = vshrl.u32 %v300, 7
      %v302 = vsub.s32 0, %v301
      %v303 = vrot.slane %v298, %v302
      %vm305 = vcmask 261120
      %v307 = vsel %vm305, %v293, 0
      %309 = vmatprep.subr.mxu0 0.0
      %310 = vmatpush1.msra.mxu0 %v294
      %311 = vmatprep.subr.mxu0 0.0
      %312 = vmatpush1.msra.mxu0 %v295
      %313 = vmatprep.subr.mxu0 0.0
      %314 = vmatpush1.msra.mxu0 %v296
      %315 = vmatprep.subr.mxu0 0.0
      %316 = vmatpush1.msra.mxu0 %v297
      %317 = vmatprep.subr.mxu0 0.0
      %318 = vmatpush1.msra.mxu0 0.0
      %319 = vmatprep.subr.mxu0 0.0
      %320 = vmatpush1.msra.mxu0 0.0
      %321 = vmatprep.subr.mxu0 0.0
      %322 = vmatpush1.msra.mxu0 0.0
      %323 = vmatprep.subr.mxu0 0.0
      %324 = vmatpush1.msra.mxu0 0.0
      %325 = vmatprep.subr.mxu0 0.0
      %326 = vmatpush1.msra.mxu0 0.0
      %327 = vmatprep.subr.mxu0 0.0
      %328 = vmatpush1.msra.mxu0 0.0
      %329 = vmatprep.subr.mxu0 0.0
      %330 = vmatpush1.msra.mxu0 0.0
      %331 = vmatprep.subr.mxu0 0.0
      %332 = vmatpush1.msra.mxu0 0.0
      %333 = vmatprep.subr.mxu0 0.0
      %334 = vmatpush1.msra.mxu0 0.0
      %335 = vmatprep.subr.mxu0 0.0
      %336 = vmatpush1.msra.mxu0 0.0
      %337 = vmatprep.subr.mxu0 0.0
      %338 = vmatpush1.msra.mxu0 0.0
      %339 = vmatprep.subr.mxu0 0.0
      %340 = vmatpush1.msra.mxu0 0.0
      %341 = vmatprep.subr.mxu0 0.0
      %342 = vmatpush1.msra.mxu0 0.0
      %343 = vmatprep.subr.mxu0 0.0
      %344 = vmatpush1.msra.mxu0 0.0
      %345 = vmatprep.subr.mxu0 0.0
      %346 = vmatpush1.msra.mxu0 0.0
      %347 = vmatprep.subr.mxu0 0.0
      %348 = vmatpush1.msra.mxu0 0.0
      %349 = vmatprep.subr.mxu0 0.0
      %350 = vmatpush1.msra.mxu0 0.0
      %351 = vmatprep.subr.mxu0 0.0
      %352 = vmatpush1.msra.mxu0 0.0
      %353 = vmatprep.subr.mxu0 0.0
      %354 = vmatpush1.msra.mxu0 0.0
      %355 = vmatprep.subr.mxu0 0.0
      %356 = vmatpush1.msra.mxu0 0.0
      %357 = vmatprep.subr.mxu0 0.0
      %358 = vmatpush1.msra.mxu0 0.0
      %359 = vmatprep.subr.mxu0 0.0
      %360 = vmatpush1.msra.mxu0 0.0
      %361 = vmatprep.subr.mxu0 0.0
      %362 = vmatpush1.msra.mxu0 0.0
      %363 = vmatprep.subr.mxu0 0.0
      %364 = vmatpush1.msra.mxu0 0.0
      %365 = vmatprep.subr.mxu0 0.0
      %366 = vmatpush1.msra.mxu0 0.0
      %367 = vmatprep.subr.mxu0 0.0
      %368 = vmatpush1.msra.mxu0 0.0
      %369 = vmatprep.subr.mxu0 0.0
      %370 = vmatpush1.msra.mxu0 0.0
      %371 = vmatprep.subr.mxu0 0.0
      %372 = vmatpush1.msra.mxu0 0.0
      %373 = vmatprep.mubr.f32.mxu0 0.0
      %374 = vmatmul.mubr.f32.gmra.mrb[0].mxu0 %v307
      %v375 = vpop.f32.mrb[0].mxu0
      %v376 = vadd.f32 %v303, %v375
      %v377 = vpop.f32.mrb[0].mxu0
      %378 = vdwg.mxu0
      %vm379 = vcmask 64512
      %380 = vst.msk [vmem:[%s292] sm:$0xff] %vm379, %v376
      %p381 = scmp.lt.s32.totalorder %s22, 2
      %s382 = scalar_select %p381, %s22, 2
      %p383 = scmp.lt.s32.totalorder %s20, 1
      %s384 = scalar_select %p383, %s20, 1
      %p385 = scmp.lt.s32.totalorder %s23, 3
      %s386 = scalar_select %p385, %s23, 3
      %p387 = scmp.lt.s32.totalorder %s21, 0
      %s388 = scalar_select %p387, %s21, 0
      %s389 = sadd.s32 %s388, %s386
      %s390 = smul.addr %s384, 4
      %s391 = sadd.s32 %s389, %s390
      %s392 = smul.addr %s382, 8
      %s393 = sadd.s32 %s391, %s392
      %s394 = smul.addr %s393, 8
      %s395 = scalar_lea.vmem %s3, %s394
      // Predicated region
      $region33: #{attention_forward.3} parent=31 // pred_check
        %p396 = pneg %p148
      $region34: #{attention_forward.3} parent=31 // pred_check_branch
        %398 = sbr.rel (%p396) target = $region36
      $region35: #{attention_forward.3} parent=31 // pred_region
        _
      $region36: #{attention_forward.3} parent=31 // pred_fallthru
        _
    $region32: #{attention_forward.3} parent=5 // pred_fallthru
      _
    %p399 = scmp.le.s32.totalorder 2, %s9
    // Predicated region
    $region37: #{attention_forward.3} parent=5 // pred_check
      %p400 = pneg %p399
    $region38: #{attention_forward.3} parent=5 // pred_check_branch
      %402 = sbr.rel (%p400) target = $region40
    $region39: #{attention_forward.3} parent=5 // pred_region
      %s403 = ssub.s32 %s9, 2
      // Predicated region
      $region41: #{attention_forward.3} parent=39 // pred_check
        %p404 = pneg %p154
      $region42: #{attention_forward.3} parent=39 // pred_check_branch
        %406 = sbr.rel (%p404) target = $region44
      $region43: #{attention_forward.3} parent=39 // pred_region
        %p407 = scmp.lt.s32.totalorder %s26, 2
        %s408 = scalar_select %p407, %s26, 2
        %p409 = scmp.lt.s32.totalorder %s24, 1
        %s410 = scalar_select %p409, %s24, 1
        %p411 = scmp.lt.s32.totalorder %s27, 3
        %s412 = scalar_select %p411, %s27, 3
        %p413 = scmp.lt.s32.totalorder %s25, 0
        %s414 = scalar_select %p413, %s25, 0
        %s415 = sadd.s32 %s414, %s412
        %s416 = smul.addr %s410, 4
        %s417 = sadd.s32 %s415, %s416
        %s418 = smul.addr %s408, 8
        %s419 = sadd.s32 %s417, %s418
        %s420 = smul.addr %s419, 8
        %s421 = scalar_lea.vmem %s3, %s420
      $region44: #{attention_forward.3} parent=39 // pred_fallthru
        _
    $region40: #{attention_forward.3} parent=5 // pred_fallthru
      _
  $region6: #{attention_forward.3} parent=0 // loop_footer
    %s13 = sadd.s32 1, %s9
  $region7: #{attention_forward.3} parent=0 // loop_footer_branch
    %8 = sbr.rel target = $region3
  $region8: #{attention_forward.3} parent=0 // loop_exit
    _

// kernel: attention_forward.4
$region0: #{attention_forward.4}
  #allocation0 [shape = 'u32[]', space=smem, size = 0x4, offset = 0x4, fixed_abs, tag = 'smem constant byte address 0x4 - core index']
  #allocation1 [shape = 'u32[144,128]{1,0:T(1,128)}', space=vmem, size = 0x12000, scoped, tag = 'internal scratch']
  #allocation2 [shape = 'f32[4,8,1]{2,1,0:T(8,128)}', space=vmem, size = 0x4000, scoped, tag = 'scratch operand']
  #allocation3 [shape = 'f32[4,8,1]{2,1,0:T(8,128)}', space=vmem, size = 0x4000, scoped, tag = 'scratch operand']
  #allocation4 [shape = 'f32[4,8,8]{2,1,0:T(8,128)}', space=vmem, size = 0x4000, scoped, tag = 'scratch operand']
  %s0 = inlined_call_operand.vmem [shape: f32[3,2,4,8,8], index: 0, kind: input, shape index: {}, may-alias: {0,1,2}]
  %s1 = inlined_call_operand.vmem [shape: f32[3,2,4,8,8], index: 1, kind: input, shape index: {}, may-alias: {0,1,2}]
  %s2 = inlined_call_operand.vmem [shape: f32[3,2,4,8,8], index: 2, kind: input, shape index: {}, may-alias: {0,1,2}]
  %s3 = inlined_call_operand.vmem [shape: f32[2,8,32], index: 3, kind: output, shape index: {}]
  %s4 = sld [smem:[#allocation0]]
  $region53: #{attention_forward.4} parent=0
    _
  %s6 = ssub.s32 1, %s4
  %s7 = scalar_select 0, %s6, %s4
  loop: start=0, step=1, limit=4
  $region2: #{attention_forward.4} parent=0 // loop_pre_header
    _
  $region3: #{attention_forward.4} parent=0 // loop_header
    %s9 = sphi 0, %s13
    %p10 = scmp.ge.s32.totalorder %s9, 4
    %s16 = sphi 0, %s35
    %s17 = sphi 0, %s31
    %s18 = sphi 0, %s27
    %s19 = sphi 0, %s16
    %s20 = sphi 0, %s17
    %s21 = sphi 0, %s18
    %s22 = sphi 0, %s19
    %s23 = sphi 0, %s20
    %s24 = sphi 0, %s21
    %s40 = sphi 0, %s42
    %s43 = sphi 0, %s40
    %s44 = sphi 0, %s43
    %s60 = sphi 0, %s44
    %s68 = sphi 0, %s70
    %s71 = sphi 0, %s68
    %s72 = sphi 0, %s71
    %s88 = sphi 0, %s72
    %s96 = sphi 0, %s98
    %s99 = sphi 0, %s96
    %s100 = sphi 0, %s99
    %s116 = sphi 0, %s100
    %s124 = sphi 0, %s126
    %s127 = sphi 0, %s124
    %s128 = sphi 0, %s127
    %s144 = sphi 0, %s128
  $region4: #{attention_forward.4} parent=0 // loop_header_branch
    %12 = sbr.rel (%p10) target = $region8
  $region5: #{attention_forward.4} parent=0 // loop_body
    %s14 = ssub.s32 %s9, 1
    %s15 = ssub.s32 %s9, 2
    %s25 = sadd.s32 1, %s18
    %p26 = scmp.ge.s32.totalorder %s25, 1
    %s27 = scalar_select %p26, 0, %s25
    %s28 = sadd.s32 1, %s17
    %s29 = scalar_select %p26, %s28, %s17
    %p30 = scmp.ge.s32.totalorder %s29, 1
    %s31 = scalar_select %p30, 0, %s29
    %s32 = sadd.s32 1, %s16
    %s33 = scalar_select %p30, %s32, %s16
    %p34 = scmp.ge.s32.totalorder %s33, 2
    %s35 = scalar_select %p34, 0, %s33
    %s36 = ssub.s32 %s16, %s35
    %s37 = ssub.s32 %s17, %s31
    %s38 = sor.u32 %s36, %s37
    %p39 = scmp.eq.s32.totalorder %s38, 0
    %s41 = sadd.s32 %s40, 1
    %s42 = scalar_select %p39, %s40, %s41
    %p45 = pneg %p39
    %p46 = scmp.eq.s32.totalorder %s9, 1
    %p47 = por %p45, %p46
    %p48 = scmp.ne.s32.totalorder %s40, %s43
    %p49 = scmp.eq.s32.totalorder %s9, 0
    %p50 = por %p48, %p49
    %p51 = scmp.ne.s32.totalorder %s40, %s43
    %p52 = scmp.eq.s32.totalorder %s14, 1
    %p53 = por %p51, %p52
    %p54 = scmp.ne.s32.totalorder %s43, %s44
    %p55 = scmp.eq.s32.totalorder %s14, 0
    %p56 = por %p54, %p55
    %p57 = scmp.ne.s32.totalorder %s43, %s44
    %p58 = scmp.eq.s32.totalorder %s15, 1
    %p59 = por %p57, %p58
    %p61 = scmp.ne.s32.totalorder %s44, %s60
    %p62 = scmp.eq.s32.totalorder %s15, 0
    %p63 = por %p61, %p62
    %s64 = ssub.s32 %s16, %s35
    %s65 = ssub.s32 %s18, %s27
    %s66 = sor.u32 %s64, %s65
    %p67 = scmp.eq.s32.totalorder %s66, 0
    %s69 = sadd.s32 %s68, 1
    %s70 = scalar_select %p67, %s68, %s69
    %p73 = pneg %p67
    %p74 = scmp.eq.s32.totalorder %s9, 1
    %p75 = por %p73, %p74
    %p76 = scmp.ne.s32.totalorder %s68, %s71
    %p77 = scmp.eq.s32.totalorder %s9, 0
    %p78 = por %p76, %p77
    %p79 = scmp.ne.s32.totalorder %s68, %s71
    %p80 = scmp.eq.s32.totalorder %s14, 1
    %p81 = por %p79, %p80
    %p82 = scmp.ne.s32.totalorder %s71, %s72
    %p83 = scmp.eq.s32.totalorder %s14, 0
    %p84 = por %p82, %p83
    %p85 = scmp.ne.s32.totalorder %s71, %s72
    %p86 = scmp.eq.s32.totalorder %s15, 1
    %p87 = por %p85, %p86
    %p89 = scmp.ne.s32.totalorder %s72, %s88
    %p90 = scmp.eq.s32.totalorder %s15, 0
    %p91 = por %p89, %p90
    %s92 = ssub.s32 %s16, %s35
    %s93 = ssub.s32 %s18, %s27
    %s94 = sor.u32 %s92, %s93
    %p95 = scmp.eq.s32.totalorder %s94, 0
    %s97 = sadd.s32 %s96, 1
    %s98 = scalar_select %p95, %s96, %s97
    %p101 = pneg %p95
    %p102 = scmp.eq.s32.totalorder %s9, 1
    %p103 = por %p101, %p102
    %p104 = scmp.ne.s32.totalorder %s96, %s99
    %p105 = scmp.eq.s32.totalorder %s9, 0
    %p106 = por %p104, %p105
    %p107 = scmp.ne.s32.totalorder %s96, %s99
    %p108 = scmp.eq.s32.totalorder %s14, 1
    %p109 = por %p107, %p108
    %p110 = scmp.ne.s32.totalorder %s99, %s100
    %p111 = scmp.eq.s32.totalorder %s14, 0
    %p112 = por %p110, %p111
    %p113 = scmp.ne.s32.totalorder %s99, %s100
    %p114 = scmp.eq.s32.totalorder %s15, 1
    %p115 = por %p113, %p114
    %p117 = scmp.ne.s32.totalorder %s100, %s116
    %p118 = scmp.eq.s32.totalorder %s15, 0
    %p119 = por %p117, %p118
    %s120 = ssub.s32 %s16, %s35
    %s121 = ssub.s32 %s17, %s31
    %s122 = sor.u32 %s120, %s121
    %p123 = scmp.eq.s32.totalorder %s122, 0
    %s125 = sadd.s32 %s124, 1
    %s126 = scalar_select %p123, %s124, %s125
    %p129 = pneg %p123
    %p130 = scmp.eq.s32.totalorder %s9, 1
    %p131 = por %p129, %p130
    %p132 = scmp.ne.s32.totalorder %s124, %s127
    %p133 = scmp.eq.s32.totalorder %s9, 0
    %p134 = por %p132, %p133
    %p135 = scmp.ne.s32.totalorder %s124, %s127
    %p136 = scmp.eq.s32.totalorder %s14, 1
    %p137 = por %p135, %p136
    %p138 = scmp.ne.s32.totalorder %s127, %s128
    %p139 = scmp.eq.s32.totalorder %s14, 0
    %p140 = por %p138, %p139
    %p141 = scmp.ne.s32.totalorder %s127, %s128
    %p142 = scmp.eq.s32.totalorder %s15, 1
    %p143 = por %p141, %p142
    %p145 = scmp.ne.s32.totalorder %s128, %s144
    %p146 = scmp.eq.s32.totalorder %s15, 0
    %p147 = por %p145, %p146
    %p148 = scmp.le.s32.totalorder 1, %s9
    %p149 = scmp.lt.s32.totalorder %s9, 3
    %p150 = pnand %p148, %p149
    %p151 = pneg %p150
    // Predicated region
    $region9: #{attention_forward.4} parent=5 // pred_check
      _
    $region10: #{attention_forward.4} parent=5 // pred_check_branch
      %153 = sbr.rel (%p150) target = $region12
    $region11: #{attention_forward.4} parent=5 // pred_region
      %s154 = ssub.s32 %s9, 1
    $region12: #{attention_forward.4} parent=5 // pred_fallthru
      _
    %p155 = scmp.lt.s32.totalorder %s9, 2
    // Predicated region
    $region13: #{attention_forward.4} parent=5 // pred_check
      %p156 = pneg %p155
    $region14: #{attention_forward.4} parent=5 // pred_check_branch
      %158 = sbr.rel (%p156) target = $region16
    $region15: #{attention_forward.4} parent=5 // pred_region
      // Predicated region
      $region17: #{attention_forward.4} parent=15 // pred_check
        %p159 = pneg %p50
      $region18: #{attention_forward.4} parent=15 // pred_check_branch
        %161 = sbr.rel (%p159) target = $region20
      $region19: #{attention_forward.4} parent=15 // pred_region
        %p162 = scmp.lt.s32.totalorder %s16, 1
        %s163 = scalar_select %p162, %s16, 1
        %p164 = scmp.lt.s32.totalorder %s17, 0
        %s165 = scalar_select %p164, %s17, 0
        %s166 = smul.addr %s163, 4
        %s167 = sadd.s32 %s165, %s166
        %s168 = smul.addr %s167, 8
        %s169 = scalar_lea.vmem %s0, %s168
      $region20: #{attention_forward.4} parent=15 // pred_fallthru
        _
      // Predicated region
      $region21: #{attention_forward.4} parent=15 // pred_check
        %p170 = pneg %p78
      $region22: #{attention_forward.4} parent=15 // pred_check_branch
        %172 = sbr.rel (%p170) target = $region24
      $region23: #{attention_forward.4} parent=15 // pred_region
        %p173 = scmp.lt.s32.totalorder %s16, 1
        %s174 = scalar_select %p173, %s16, 1
        %p175 = scmp.lt.s32.totalorder %s18, 0
        %s176 = scalar_select %p175, %s18, 0
        %s177 = smul.addr %s174, 4
        %s178 = sadd.s32 %s176, %s177
        %s179 = sadd.s32 %s178, 8
        %s180 = smul.addr %s179, 8
        %s181 = scalar_lea.vmem %s1, %s180
      $region24: #{attention_forward.4} parent=15 // pred_fallthru
        _
      // Predicated region
      $region25: #{attention_forward.4} parent=15 // pred_check
        %p182 = pneg %p106
      $region26: #{attention_forward.4} parent=15 // pred_check_branch
        %184 = sbr.rel (%p182) target = $region28
      $region27: #{attention_forward.4} parent=15 // pred_region
        %p185 = scmp.lt.s32.totalorder %s16, 1
        %s186 = scalar_select %p185, %s16, 1
        %p187 = scmp.lt.s32.totalorder %s18, 0
        %s188 = scalar_select %p187, %s18, 0
        %s189 = smul.addr %s186, 4
        %s190 = sadd.s32 %s188, %s189
        %s191 = sadd.s32 %s190, 16
        %s192 = smul.addr %s191, 8
        %s193 = scalar_lea.vmem %s2, %s192
      $region28: #{attention_forward.4} parent=15 // pred_fallthru
        _
    $region16: #{attention_forward.4} parent=5 // pred_fallthru
      _
    %p194 = scmp.le.s32.totalorder 1, %s9
    %p195 = scmp.lt.s32.totalorder %s9, 3
    %p196 = pnand %p194, %p195
    %p197 = pneg %p196
    // Predicated region
    $region29: #{attention_forward.4} parent=5 // pred_check
      _
    $region30: #{attention_forward.4} parent=5 // pred_check_branch
      %199 = sbr.rel (%p196) target = $region32
    $region31: #{attention_forward.4} parent=5 // pred_region
      %s200 = ssub.s32 %s9, 1
      %p201 = scmp.lt.s32.totalorder %s19, 1
      %s202 = scalar_select %p201, %s19, 1
      %p203 = scmp.lt.s32.totalorder %s20, 0
      %s204 = scalar_select %p203, %s20, 0
      %s205 = smul.addr %s202, 4
      %s206 = sadd.s32 %s204, %s205
      %s207 = smul.addr %s206, 8
      %s208 = scalar_lea.vmem %s0, %s207
      %p209 = pneg %p56
      %p210 = pneg %p53
      %p211 = scmp.lt.s32.totalorder %s19, 1
      %s212 = scalar_select %p211, %s19, 1
      %p213 = scmp.lt.s32.totalorder %s21, 0
      %s214 = scalar_select %p213, %s21, 0
      %s215 = smul.addr %s212, 4
      %s216 = sadd.s32 %s214, %s215
      %s217 = sadd.s32 %s216, 8
      %s218 = smul.addr %s217, 8
      %s219 = scalar_lea.vmem %s1, %s218
      %p220 = pneg %p84
      %p221 = pneg %p81
      %p222 = scmp.lt.s32.totalorder %s19, 1
      %s223 = scalar_select %p222, %s19, 1
      %p224 = scmp.lt.s32.totalorder %s21, 0
      %s225 = scalar_select %p224, %s21, 0
      %s226 = smul.addr %s223, 4
      %s227 = sadd.s32 %s225, %s226
      %s228 = sadd.s32 %s227, 16
      %s229 = smul.addr %s228, 8
      %s230 = scalar_lea.vmem %s2, %s229
      %p231 = pneg %p112
      %p232 = pneg %p109
      %p233 = pneg %p140
      %p234 = pneg %p137
      %p235 = scmp.lt.s32.totalorder %s19, 1
      %s236 = scalar_select %p235, %s19, 1
      %p237 = scmp.lt.s32.totalorder %s20, 0
      %s238 = scalar_select %p237, %s20, 0
      %s239 = sadd.s32 %s238, %s236
      %s240 = smul.addr %s239, 8
      %s241 = scalar_lea.vmem %s3, %s240
      %p242 = scmp.lt.s32.totalorder %s19, 1
      %s243 = scalar_select %p242, %s19, 1
      %p244 = scmp.lt.s32.totalorder %s20, 0
      %s245 = scalar_select %p244, %s20, 0
      %s246 = smul.addr %s243, 4
      %s247 = sadd.s32 %s245, %s246
      %s248 = smul.addr %s247, 8
      %s249 = scalar_lea.vmem %s0, %s248
      %p250 = scmp.lt.s32.totalorder %s19, 1
      %s251 = scalar_select %p250, %s19, 1
      %p252 = scmp.lt.s32.totalorder %s21, 0
      %s253 = scalar_select %p252, %s21, 0
      %s254 = smul.addr %s251, 4
      %s255 = sadd.s32 %s253, %s254
      %s256 = sadd.s32 %s255, 8
      %s257 = smul.addr %s256, 8
      %s258 = scalar_lea.vmem %s1, %s257
      %p259 = scmp.lt.s32.totalorder %s19, 1
      %s260 = scalar_select %p259, %s19, 1
      %p261 = scmp.lt.s32.totalorder %s21, 0
      %s262 = scalar_select %p261, %s21, 0
      %s263 = smul.addr %s260, 4
      %s264 = sadd.s32 %s262, %s263
      %s265 = sadd.s32 %s264, 16
      %s266 = smul.addr %s265, 8
      %s267 = scalar_lea.vmem %s2, %s266
      %p268 = scmp.lt.s32.totalorder %s19, 1
      %s269 = scalar_select %p268, %s19, 1
      %p270 = scmp.lt.s32.totalorder %s20, 0
      %s271 = scalar_select %p270, %s20, 0
      %s272 = sadd.s32 %s271, %s269
      %s273 = smul.addr %s272, 8
      %s274 = scalar_lea.vmem %s3, %s273
      %p275 = scmp.eq.s32.totalorder %s21, 0
      // Predicated region
      $region33: #{attention_forward.4} parent=31 // pred_check
        %p276 = pneg %p275
      $region34: #{attention_forward.4} parent=31 // pred_check_branch
        %278 = sbr.rel (%p276) target = $region36
      $region35: #{attention_forward.4} parent=31 // pred_region
        %vm279 = vcmask 7168
        %280 = vst.msk [vmem:[#allocation2] sm:$0xff] %vm279, -inf
        %281 = vst.msk [vmem:[#allocation2 + $0x8] sm:$0xff] %vm279, -inf
        %282 = vst.msk [vmem:[#allocation2 + $0x10] sm:$0xff] %vm279, -inf
        %283 = vst.msk [vmem:[#allocation2 + $0x18] sm:$0xff] %vm279, -inf
        %284 = vst.msk [vmem:[#allocation3] sm:$0xff] %vm279, 0.0
        %285 = vst.msk [vmem:[#allocation3 + $0x8] sm:$0xff] %vm279, 0.0
        %286 = vst.msk [vmem:[#allocation3 + $0x10] sm:$0xff] %vm279, 0.0
        %287 = vst.msk [vmem:[#allocation3 + $0x18] sm:$0xff] %vm279, 0.0
        %vm288 = vcmask 64512
        %289 = vst.msk [vmem:[#allocation4] sm:$0xff] %vm288, 0.0
        %290 = vst.msk [vmem:[#allocation4 + $0x8] sm:$0xff] %vm288, 0.0
        %291 = vst.msk [vmem:[#allocation4 + $0x10] sm:$0xff] %vm288, 0.0
        %292 = vst.msk [vmem:[#allocation4 + $0x18] sm:$0xff] %vm288, 0.0
      $region36: #{attention_forward.4} parent=31 // pred_fallthru
        _
      %v293 = vld [vmem:[%s249] sm:$0xff]
      %v294 = vmul.f32 %v293, 0.17677669
      %v295 = vld [vmem:[%s258] sm:$0xff]
      %v296 = vld [vmem:[%s267] sm:$0xff]
      %vm297 = vcmask 64512
      %v299 = vsel %vm297, %v294, 0
      %v302 = vsel %vm297, %v295, 0
      %304 = vmatprep.subr.mxu0 0.0
      %305 = vmatpush1.xpose.msra.mxu0 %v302
      %306 = vmatprep.subr.mxu0 0.0
      %307 = vmatpush1.xpose.msra.mxu0 0.0
      %308 = vmatprep.subr.mxu0 0.0
      %309 = vmatpush1.xpose.msra.mxu0 0.0
      %310 = vmatprep.subr.mxu0 0.0
      %311 = vmatpush1.xpose.msra.mxu0 0.0
      %312 = vmatprep.subr.mxu0 0.0
      %313 = vmatpush1.xpose.msra.mxu0 0.0
      %314 = vmatprep.subr.mxu0 0.0
      %315 = vmatpush1.xpose.msra.mxu0 0.0
      %316 = vmatprep.subr.mxu0 0.0
      %317 = vmatpush1.xpose.msra.mxu0 0.0
      %318 = vmatprep.subr.mxu0 0.0
      %319 = vmatpush1.xpose.msra.mxu0 0.0
      %320 = vmatprep.subr.mxu0 0.0
      %321 = vmatpush1.xpose.msra.mxu0 0.0
      %322 = vmatprep.subr.mxu0 0.0
      %323 = vmatpush1.xpose.msra.mxu0 0.0
      %324 = vmatprep.subr.mxu0 0.0
      %325 = vmatpush1.xpose.msra.mxu0 0.0
      %326 = vmatprep.subr.mxu0 0.0
      %327 = vmatpush1.xpose.msra.mxu0 0.0
      %328 = vmatprep.subr.mxu0 0.0
      %329 = vmatpush1.xpose.msra.mxu0 0.0
      %330 = vmatprep.subr.mxu0 0.0
      %331 = vmatpush1.xpose.msra.mxu0 0.0
      %332 = vmatprep.subr.mxu0 0.0
      %333 = vmatpush1.xpose.msra.mxu0 0.0
      %334 = vmatprep.subr.mxu0 0.0
      %335 = vmatpush1.xpose.msra.mxu0 0.0
      %336 = vmatprep.subr.mxu0 0.0
      %337 = vmatpush1.xpose.msra.mxu0 0.0
      %338 = vmatprep.subr.mxu0 0.0
      %339 = vmatpush1.xpose.msra.mxu0 0.0
      %340 = vmatprep.subr.mxu0 0.0
      %341 = vmatpush1.xpose.msra.mxu0 0.0
      %342 = vmatprep.subr.mxu0 0.0
      %343 = vmatpush1.xpose.msra.mxu0 0.0
      %344 = vmatprep.subr.mxu0 0.0
      %345 = vmatpush1.xpose.msra.mxu0 0.0
      %346 = vmatprep.subr.mxu0 0.0
      %347 = vmatpush1.xpose.msra.mxu0 0.0
      %348 = vmatprep.subr.mxu0 0.0
      %349 = vmatpush1.xpose.msra.mxu0 0.0
      %350 = vmatprep.subr.mxu0 0.0
      %351 = vmatpush1.xpose.msra.mxu0 0.0
      %352 = vmatprep.subr.mxu0 0.0
      %353 = vmatpush1.xpose.msra.mxu0 0.0
      %354 = vmatprep.subr.mxu0 0.0
      %355 = vmatpush1.xpose.msra.mxu0 0.0
      %356 = vmatprep.subr.mxu0 0.0
      %357 = vmatpush1.xpose.msra.mxu0 0.0
      %358 = vmatprep.subr.mxu0 0.0
      %359 = vmatpush1.xpose.msra.mxu0 0.0
      %360 = vmatprep.subr.mxu0 0.0
      %361 = vmatpush1.xpose.msra.mxu0 0.0
      %362 = vmatprep.subr.mxu0 0.0
      %363 = vmatpush1.xpose.msra.mxu0 0.0
      %364 = vmatprep.subr.mxu0 0.0
      %365 = vmatpush1.xpose.msra.mxu0 0.0
      %366 = vmatprep.subr.mxu0 0.0
      %367 = vmatpush1.xpose.msra.mxu0 0.0
      %368 = vmatprep.mubr.f32.mxu0 0.0
      %369 = vmatmul.mubr.f32.gmra.mrb[0].mxu0 %v299
      %v370 = vpop.f32.mrb[0].mxu0
      %v371 = vadd.f32 0.0, %v370
      %v372 = vpop.f32.mrb[0].mxu0
      %373 = vdwg.mxu0
      %v374 = vld [vmem:[#allocation2] sm:$0xff]
      %v375 = vsel %vm297, %v371, -inf
      %376 = vmax.xlane.f32.xlu0 %v375
      %v377 = vpop.xlane.xlu0 %376
      %v378 = vmax.f32 %v374, %v377
      %v379 = vsub.f32 %v374, %v378
      %v380 = vmul.f32 %v379, 1.442695
      %v381 = vpow.pop %v380
      %383 = vset.pattern.permute.xlu0 0
      %384 = vperm.xlu0 %383, %v378
      %v385 = vpop.permute.xlu0 %384
      %v387 = vsub.f32 %v371, %v385
      %v388 = vmul.f32 %v387, 1.442695
      %v389 = vpow.pop %v388
      %v390 = vld [vmem:[#allocation3] sm:$0xff]
      %v391 = vmul.f32 %v381, %v390
      %v392 = vsel %vm297, %v389, 0.0
      %393 = vadd.xlane.f32.xlu0 %v392
      %v394 = vpop.xlane.xlu0 %393
      %v395 = vadd.f32 %v391, %v394
      %vm396 = vcmask 7168
      %397 = vst.msk [vmem:[#allocation3] sm:$0xff] %vm396, %v395
      %v398 = vld [vmem:[#allocation4] sm:$0xff]
      %400 = vset.pattern.permute.xlu0 0
      %401 = vperm.xlu0 %400, %v381
      %v402 = vpop.permute.xlu0 %401
      %v404 = vmul.f32 %v402, %v398
      %v406 = vsel %vm297, %v389, 0
      %408 = vmatprep.subr.mxu0 0.0
      %409 = vmatpush1.msra.mxu0 %v296
      %410 = vmatprep.subr.mxu0 0.0
      %411 = vmatpush1.msra.mxu0 0.0
      %412 = vmatprep.subr.mxu0 0.0
      %413 = vmatpush1.msra.mxu0 0.0
      %414 = vmatprep.subr.mxu0 0.0
      %415 = vmatpush1.msra.mxu0 0.0
      %416 = vmatprep.subr.mxu0 0.0
      %417 = vmatpush1.msra.mxu0 0.0
      %418 = vmatprep.subr.mxu0 0.0
      %419 = vmatpush1.msra.mxu0 0.0
      %420 = vmatprep.subr.mxu0 0.0
      %421 = vmatpush1.msra.mxu0 0.0
      %422 = vmatprep.subr.mxu0 0.0
      %423 = vmatpush1.msra.mxu0 0.0
      %424 = vmatprep.subr.mxu0 0.0
      %425 = vmatpush1.msra.mxu0 0.0
      %426 = vmatprep.subr.mxu0 0.0
      %427 = vmatpush1.msra.mxu0 0.0
      %428 = vmatprep.subr.mxu0 0.0
      %429 = vmatpush1.msra.mxu0 0.0
      %430 = vmatprep.subr.mxu0 0.0
      %431 = vmatpush1.msra.mxu0 0.0
      %432 = vmatprep.subr.mxu0 0.0
      %433 = vmatpush1.msra.mxu0 0.0
      %434 = vmatprep.subr.mxu0 0.0
      %435 = vmatpush1.msra.mxu0 0.0
      %436 = vmatprep.subr.mxu0 0.0
      %437 = vmatpush1.msra.mxu0 0.0
      %438 = vmatprep.subr.mxu0 0.0
      %439 = vmatpush1.msra.mxu0 0.0
      %440 = vmatprep.subr.mxu0 0.0
      %441 = vmatpush1.msra.mxu0 0.0
      %442 = vmatprep.subr.mxu0 0.0
      %443 = vmatpush1.msra.mxu0 0.0
      %444 = vmatprep.subr.mxu0 0.0
      %445 = vmatpush1.msra.mxu0 0.0
      %446 = vmatprep.subr.mxu0 0.0
      %447 = vmatpush1.msra.mxu0 0.0
      %448 = vmatprep.subr.mxu0 0.0
      %449 = vmatpush1.msra.mxu0 0.0
      %450 = vmatprep.subr.mxu0 0.0
      %451 = vmatpush1.msra.mxu0 0.0
      %452 = vmatprep.subr.mxu0 0.0
      %453 = vmatpush1.msra.mxu0 0.0
      %454 = vmatprep.subr.mxu0 0.0
      %455 = vmatpush1.msra.mxu0 0.0
      %456 = vmatprep.subr.mxu0 0.0
      %457 = vmatpush1.msra.mxu0 0.0
      %458 = vmatprep.subr.mxu0 0.0
      %459 = vmatpush1.msra.mxu0 0.0
      %460 = vmatprep.subr.mxu0 0.0
      %461 = vmatpush1.msra.mxu0 0.0
      %462 = vmatprep.subr.mxu0 0.0
      %463 = vmatpush1.msra.mxu0 0.0
      %464 = vmatprep.subr.mxu0 0.0
      %465 = vmatpush1.msra.mxu0 0.0
      %466 = vmatprep.subr.mxu0 0.0
      %467 = vmatpush1.msra.mxu0 0.0
      %468 = vmatprep.subr.mxu0 0.0
      %469 = vmatpush1.msra.mxu0 0.0
      %470 = vmatprep.subr.mxu0 0.0
      %471 = vmatpush1.msra.mxu0 0.0
      %472 = vmatprep.mubr.f32.mxu0 0.0
      %473 = vmatmul.mubr.f32.gmra.mrb[0].mxu0 %v406
      %v474 = vpop.f32.mrb[0].mxu0
      %v475 = vadd.f32 0.0, %v474
      %v476 = vpop.f32.mrb[0].mxu0
      %477 = vdwg.mxu0
      %v478 = vadd.f32 %v404, %v475
      %479 = vst.msk [vmem:[#allocation4] sm:$0xff] %vm297, %v478
      %480 = vst.msk [vmem:[#allocation2] sm:$0xff] %vm396, %v378
      %s481 = scalar_lea.vmem %s249, 8
      %v482 = vld [vmem:[%s481] sm:$0xff]
      %v483 = vmul.f32 %v482, 0.17677669
      %s484 = scalar_lea.vmem %s258, 8
      %v485 = vld [vmem:[%s484] sm:$0xff]
      %s486 = scalar_lea.vmem %s267, 8
      %v487 = vld [vmem:[%s486] sm:$0xff]
      %v489 = vsel %vm297, %v483, 0
      %v492 = vsel %vm297, %v485, 0
      %494 = vmatprep.subr.mxu0 0.0
      %495 = vmatpush1.xpose.msra.mxu0 %v492
      %496 = vmatprep.subr.mxu0 0.0
      %497 = vmatpush1.xpose.msra.mxu0 0.0
      %498 = vmatprep.subr.mxu0 0.0
      %499 = vmatpush1.xpose.msra.mxu0 0.0
      %500 = vmatprep.subr.mxu0 0.0
      %501 = vmatpush1.xpose.msra.mxu0 0.0
      %502 = vmatprep.subr.mxu0 0.0
      %503 = vmatpush1.xpose.msra.mxu0 0.0
      %504 = vmatprep.subr.mxu0 0.0
      %505 = vmatpush1.xpose.msra.mxu0 0.0
      %506 = vmatprep.subr.mxu0 0.0
      %507 = vmatpush1.xpose.msra.mxu0 0.0
      %508 = vmatprep.subr.mxu0 0.0
      %509 = vmatpush1.xpose.msra.mxu0 0.0
      %510 = vmatprep.subr.mxu0 0.0
      %511 = vmatpush1.xpose.msra.mxu0 0.0
      %512 = vmatprep.subr.mxu0 0.0
      %513 = vmatpush1.xpose.msra.mxu0 0.0
      %514 = vmatprep.subr.mxu0 0.0
      %515 = vmatpush1.xpose.msra.mxu0 0.0
      %516 = vmatprep.subr.mxu0 0.0
      %517 = vmatpush1.xpose.msra.mxu0 0.0
      %518 = vmatprep.subr.mxu0 0.0
      %519 = vmatpush1.xpose.msra.mxu0 0.0
      %520 = vmatprep.subr.mxu0 0.0
      %521 = vmatpush1.xpose.msra.mxu0 0.0
      %522 = vmatprep.subr.mxu0 0.0
      %523 = vmatpush1.xpose.msra.mxu0 0.0
      %524 = vmatprep.subr.mxu0 0.0
      %525 = vmatpush1.xpose.msra.mxu0 0.0
      %526 = vmatprep.subr.mxu0 0.0
      %527 = vmatpush1.xpose.msra.mxu0 0.0
      %528 = vmatprep.subr.mxu0 0.0
      %529 = vmatpush1.xpose.msra.mxu0 0.0
      %530 = vmatprep.subr.mxu0 0.0
      %531 = vmatpush1.xpose.msra.mxu0 0.0
      %532 = vmatprep.subr.mxu0 0.0
      %533 = vmatpush1.xpose.msra.mxu0 0.0
      %534 = vmatprep.subr.mxu0 0.0
      %535 = vmatpush1.xpose.msra.mxu0 0.0
      %536 = vmatprep.subr.mxu0 0.0
      %537 = vmatpush1.xpose.msra.mxu0 0.0
      %538 = vmatprep.subr.mxu0 0.0
      %539 = vmatpush1.xpose.msra.mxu0 0.0
      %540 = vmatprep.subr.mxu0 0.0
      %541 = vmatpush1.xpose.msra.mxu0 0.0
      %542 = vmatprep.subr.mxu0 0.0
      %543 = vmatpush1.xpose.msra.mxu0 0.0
      %544 = vmatprep.subr.mxu0 0.0
      %545 = vmatpush1.xpose.msra.mxu0 0.0
      %546 = vmatprep.subr.mxu0 0.0
      %547 = vmatpush1.xpose.msra.mxu0 0.0
      %548 = vmatprep.subr.mxu0 0.0
      %549 = vmatpush1.xpose.msra.mxu0 0.0
      %550 = vmatprep.subr.mxu0 0.0
      %551 = vmatpush1.xpose.msra.mxu0 0.0
      %552 = vmatprep.subr.mxu0 0.0
      %553 = vmatpush1.xpose.msra.mxu0 0.0
      %554 = vmatprep.subr.mxu0 0.0
      %555 = vmatpush1.xpose.msra.mxu0 0.0
      %556 = vmatprep.subr.mxu0 0.0
      %557 = vmatpush1.xpose.msra.mxu0 0.0
      %558 = vmatprep.mubr.f32.mxu0 0.0
      %559 = vmatmul.mubr.f32.gmra.mrb[0].mxu0 %v489
      %v560 = vpop.f32.mrb[0].mxu0
      %v561 = vadd.f32 0.0, %v560
      %v562 = vpop.f32.mrb[0].mxu0
      %563 = vdwg.mxu0
      %s564 = scalar_lea.vmem [#allocation2], 8
      %v565 = vld [vmem:[%s564] sm:$0xff]
      %v566 = vsel %vm297, %v561, -inf
      %567 = vmax.xlane.f32.xlu0 %v566
      %v568 = vpop.xlane.xlu0 %567
      %v569 = vmax.f32 %v565, %v568
      %v570 = vsub.f32 %v565, %v569
      %v571 = vmul.f32 %v570, 1.442695
      %v572 = vpow.pop %v571
      %574 = vset.pattern.permute.xlu0 0
      %575 = vperm.xlu0 %574, %v569
      %v576 = vpop.permute.xlu0 %575
      %v578 = vsub.f32 %v561, %v576
      %v579 = vmul.f32 %v578, 1.442695
      %v580 = vpow.pop %v579
      %s581 = scalar_lea.vmem [#allocation3], 8
      %v582 = vld [vmem:[%s581] sm:$0xff]
      %v583 = vmul.f32 %v572, %v582
      %v584 = vsel %vm297, %v580, 0.0
      %585 = vadd.xlane.f32.xlu0 %v584
      %v586 = vpop.xlane.xlu0 %585
      %v587 = vadd.f32 %v583, %v586
      %588 = vst.msk [vmem:[%s581] sm:$0xff] %vm396, %v587
      %s589 = scalar_lea.vmem [#allocation4], 8
      %v590 = vld [vmem:[%s589] sm:$0xff]
      %592 = vset.pattern.permute.xlu0 0
      %593 = vperm.xlu0 %592, %v572
      %v594 = vpop.permute.xlu0 %593
      %v596 = vmul.f32 %v594, %v590
      %v598 = vsel %vm297, %v580, 0
      %600 = vmatprep.subr.mxu0 0.0
      %601 = vmatpush1.msra.mxu0 %v487
      %602 = vmatprep.subr.mxu0 0.0
      %603 = vmatpush1.msra.mxu0 0.0
      %604 = vmatprep.subr.mxu0 0.0
      %605 = vmatpush1.msra.mxu0 0.0
      %606 = vmatprep.subr.mxu0 0.0
      %607 = vmatpush1.msra.mxu0 0.0
      %608 = vmatprep.subr.mxu0 0.0
      %609 = vmatpush1.msra.mxu0 0.0
      %610 = vmatprep.subr.mxu0 0.0
      %611 = vmatpush1.msra.mxu0 0.0
      %612 = vmatprep.subr.mxu0 0.0
      %613 = vmatpush1.msra.mxu0 0.0
      %614 = vmatprep.subr.mxu0 0.0
      %615 = vmatpush1.msra.mxu0 0.0
      %616 = vmatprep.subr.mxu0 0.0
      %617 = vmatpush1.msra.mxu0 0.0
      %618 = vmatprep.subr.mxu0 0.0
      %619 = vmatpush1.msra.mxu0 0.0
      %620 = vmatprep.subr.mxu0 0.0
      %621 = vmatpush1.msra.mxu0 0.0
      %622 = vmatprep.subr.mxu0 0.0
      %623 = vmatpush1.msra.mxu0 0.0
      %624 = vmatprep.subr.mxu0 0.0
      %625 = vmatpush1.msra.mxu0 0.0
      %626 = vmatprep.subr.mxu0 0.0
      %627 = vmatpush1.msra.mxu0 0.0
      %628 = vmatprep.subr.mxu0 0.0
      %629 = vmatpush1.msra.mxu0 0.0
      %630 = vmatprep.subr.mxu0 0.0
      %631 = vmatpush1.msra.mxu0 0.0
      %632 = vmatprep.subr.mxu0 0.0
      %633 = vmatpush1.msra.mxu0 0.0
      %634 = vmatprep.subr.mxu0 0.0
      %635 = vmatpush1.msra.mxu0 0.0
      %636 = vmatprep.subr.mxu0 0.0
      %637 = vmatpush1.msra.mxu0 0.0
      %638 = vmatprep.subr.mxu0 0.0
      %639 = vmatpush1.msra.mxu0 0.0
      %640 = vmatprep.subr.mxu0 0.0
      %641 = vmatpush1.msra.mxu0 0.0
      %642 = vmatprep.subr.mxu0 0.0
      %643 = vmatpush1.msra.mxu0 0.0
      %644 = vmatprep.subr.mxu0 0.0
      %645 = vmatpush1.msra.mxu0 0.0
      %646 = vmatprep.subr.mxu0 0.0
      %647 = vmatpush1.msra.mxu0 0.0
      %648 = vmatprep.subr.mxu0 0.0
      %649 = vmatpush1.msra.mxu0 0.0
      %650 = vmatprep.subr.mxu0 0.0
      %651 = vmatpush1.msra.mxu0 0.0
      %652 = vmatprep.subr.mxu0 0.0
      %653 = vmatpush1.msra.mxu0 0.0
      %654 = vmatprep.subr.mxu0 0.0
      %655 = vmatpush1.msra.mxu0 0.0
      %656 = vmatprep.subr.mxu0 0.0
      %657 = vmatpush1.msra.mxu0 0.0
      %658 = vmatprep.subr.mxu0 0.0
      %659 = vmatpush1.msra.mxu0 0.0
      %660 = vmatprep.subr.mxu0 0.0
      %661 = vmatpush1.msra.mxu0 0.0
      %662 = vmatprep.subr.mxu0 0.0
      %663 = vmatpush1.msra.mxu0 0.0
      %664 = vmatprep.mubr.f32.mxu0 0.0
      %665 = vmatmul.mubr.f32.gmra.mrb[0].mxu0 %v598
      %v666 = vpop.f32.mrb[0].mxu0
      %v667 = vadd.f32 0.0, %v666
      %v668 = vpop.f32.mrb[0].mxu0
      %669 = vdwg.mxu0
      %v670 = vadd.f32 %v596, %v667
      %671 = vst.msk [vmem:[%s589] sm:$0xff] %vm297, %v670
      %672 = vst.msk [vmem:[%s564] sm:$0xff] %vm396, %v569
      %s673 = scalar_lea.vmem %s249, 16
      %v674 = vld [vmem:[%s673] sm:$0xff]
      %v675 = vmul.f32 %v674, 0.17677669
      %s676 = scalar_lea.vmem %s258, 16
      %v677 = vld [vmem:[%s676] sm:$0xff]
      %s678 = scalar_lea.vmem %s267, 16
      %v679 = vld [vmem:[%s678] sm:$0xff]
      %v681 = vsel %vm297, %v675, 0
      %v684 = vsel %vm297, %v677, 0
      %686 = vmatprep.subr.mxu0 0.0
      %687 = vmatpush1.xpose.msra.mxu0 %v684
      %688 = vmatprep.subr.mxu0 0.0
      %689 = vmatpush1.xpose.msra.mxu0 0.0
      %690 = vmatprep.subr.mxu0 0.0
      %691 = vmatpush1.xpose.msra.mxu0 0.0
      %692 = vmatprep.subr.mxu0 0.0
      %693 = vmatpush1.xpose.msra.mxu0 0.0
      %694 = vmatprep.subr.mxu0 0.0
      %695 = vmatpush1.xpose.msra.mxu0 0.0
      %696 = vmatprep.subr.mxu0 0.0
      %697 = vmatpush1.xpose.msra.mxu0 0.0
      %698 = vmatprep.subr.mxu0 0.0
      %699 = vmatpush1.xpose.msra.mxu0 0.0
      %700 = vmatprep.subr.mxu0 0.0
      %701 = vmatpush1.xpose.msra.mxu0 0.0
      %702 = vmatprep.subr.mxu0 0.0
      %703 = vmatpush1.xpose.msra.mxu0 0.0
      %704 = vmatprep.subr.mxu0 0.0
      %705 = vmatpush1.xpose.msra.mxu0 0.0
      %706 = vmatprep.subr.mxu0 0.0
      %707 = vmatpush1.xpose.msra.mxu0 0.0
      %708 = vmatprep.subr.mxu0 0.0
      %709 = vmatpush1.xpose.msra.mxu0 0.0
      %710 = vmatprep.subr.mxu0 0.0
      %711 = vmatpush1.xpose.msra.mxu0 0.0
      %712 = vmatprep.subr.mxu0 0.0
      %713 = vmatpush1.xpose.msra.mxu0 0.0
      %714 = vmatprep.subr.mxu0 0.0
      %715 = vmatpush1.xpose.msra.mxu0 0.0
      %716 = vmatprep.subr.mxu0 0.0
      %717 = vmatpush1.xpose.msra.mxu0 0.0
      %718 = vmatprep.subr.mxu0 0.0
      %719 = vmatpush1.xpose.msra.mxu0 0.0
      %720 = vmatprep.subr.mxu0 0.0
      %721 = vmatpush1.xpose.msra.mxu0 0.0
      %722 = vmatprep.subr.mxu0 0.0
      %723 = vmatpush1.xpose.msra.mxu0 0.0
      %724 = vmatprep.subr.mxu0 0.0
      %725 = vmatpush1.xpose.msra.mxu0 0.0
      %726 = vmatprep.subr.mxu0 0.0
      %727 = vmatpush1.xpose.msra.mxu0 0.0
      %728 = vmatprep.subr.mxu0 0.0
      %729 = vmatpush1.xpose.msra.mxu0 0.0
      %730 = vmatprep.subr.mxu0 0.0
      %731 = vmatpush1.xpose.msra.mxu0 0.0
      %732 = vmatprep.subr.mxu0 0.0
      %733 = vmatpush1.xpose.msra.mxu0 0.0
      %734 = vmatprep.subr.mxu0 0.0
      %735 = vmatpush1.xpose.msra.mxu0 0.0
      %736 = vmatprep.subr.mxu0 0.0
      %737 = vmatpush1.xpose.msra.mxu0 0.0
      %738 = vmatprep.subr.mxu0 0.0
      %739 = vmatpush1.xpose.msra.mxu0 0.0
      %740 = vmatprep.subr.mxu0 0.0
      %741 = vmatpush1.xpose.msra.mxu0 0.0
      %742 = vmatprep.subr.mxu0 0.0
      %743 = vmatpush1.xpose.msra.mxu0 0.0
      %744 = vmatprep.subr.mxu0 0.0
      %745 = vmatpush1.xpose.msra.mxu0 0.0
      %746 = vmatprep.subr.mxu0 0.0
      %747 = vmatpush1.xpose.msra.mxu0 0.0
      %748 = vmatprep.subr.mxu0 0.0
      %749 = vmatpush1.xpose.msra.mxu0 0.0
      %750 = vmatprep.mubr.f32.mxu0 0.0
      %751 = vmatmul.mubr.f32.gmra.mrb[0].mxu0 %v681
      %v752 = vpop.f32.mrb[0].mxu0
      %v753 = vadd.f32 0.0, %v752
      %v754 = vpop.f32.mrb[0].mxu0
      %755 = vdwg.mxu0
      %s756 = scalar_lea.vmem [#allocation2], 16
      %v757 = vld [vmem:[%s756] sm:$0xff]
      %v758 = vsel %vm297, %v753, -inf
      %759 = vmax.xlane.f32.xlu0 %v758
      %v760 = vpop.xlane.xlu0 %759
      %v761 = vmax.f32 %v757, %v760
      %v762 = vsub.f32 %v757, %v761
      %v763 = vmul.f32 %v762, 1.442695
      %v764 = vpow.pop %v763
      %766 = vset.pattern.permute.xlu0 0
      %767 = vperm.xlu0 %766, %v761
      %v768 = vpop.permute.xlu0 %767
      %v770 = vsub.f32 %v753, %v768
      %v771 = vmul.f32 %v770, 1.442695
      %v772 = vpow.pop %v771
      %s773 = scalar_lea.vmem [#allocation3], 16
      %v774 = vld [vmem:[%s773] sm:$0xff]
      %v775 = vmul.f32 %v764, %v774
      %v776 = vsel %vm297, %v772, 0.0
      %777 = vadd.xlane.f32.xlu0 %v776
      %v778 = vpop.xlane.xlu0 %777
      %v779 = vadd.f32 %v775, %v778
      %780 = vst.msk [vmem:[%s773] sm:$0xff] %vm396, %v779
      %s781 = scalar_lea.vmem [#allocation4], 16
      %v782 = vld [vmem:[%s781] sm:$0xff]
      %784 = vset.pattern.permute.xlu0 0
      %785 = vperm.xlu0 %784, %v764
      %v786 = vpop.permute.xlu0 %785
      %v788 = vmul.f32 %v786, %v782
      %v790 = vsel %vm297, %v772, 0
      %792 = vmatprep.subr.mxu0 0.0
      %793 = vmatpush1.msra.mxu0 %v679
      %794 = vmatprep.subr.mxu0 0.0
      %795 = vmatpush1.msra.mxu0 0.0
      %796 = vmatprep.subr.mxu0 0.0
      %797 = vmatpush1.msra.mxu0 0.0
      %798 = vmatprep.subr.mxu0 0.0
      %799 = vmatpush1.msra.mxu0 0.0
      %800 = vmatprep.subr.mxu0 0.0
      %801 = vmatpush1.msra.mxu0 0.0
      %802 = vmatprep.subr.mxu0 0.0
      %803 = vmatpush1.msra.mxu0 0.0
      %804 = vmatprep.subr.mxu0 0.0
      %805 = vmatpush1.msra.mxu0 0.0
      %806 = vmatprep.subr.mxu0 0.0
      %807 = vmatpush1.msra.mxu0 0.0
      %808 = vmatprep.subr.mxu0 0.0
      %809 = vmatpush1.msra.mxu0 0.0
      %810 = vmatprep.subr.mxu0 0.0
      %811 = vmatpush1.msra.mxu0 0.0
      %812 = vmatprep.subr.mxu0 0.0
      %813 = vmatpush1.msra.mxu0 0.0
      %814 = vmatprep.subr.mxu0 0.0
      %815 = vmatpush1.msra.mxu0 0.0
      %816 = vmatprep.subr.mxu0 0.0
      %817 = vmatpush1.msra.mxu0 0.0
      %818 = vmatprep.subr.mxu0 0.0
      %819 = vmatpush1.msra.mxu0 0.0
      %820 = vmatprep.subr.mxu0 0.0
      %821 = vmatpush1.msra.mxu0 0.0
      %822 = vmatprep.subr.mxu0 0.0
      %823 = vmatpush1.msra.mxu0 0.0
      %824 = vmatprep.subr.mxu0 0.0
      %825 = vmatpush1.msra.mxu0 0.0
      %826 = vmatprep.subr.mxu0 0.0
      %827 = vmatpush1.msra.mxu0 0.0
      %828 = vmatprep.subr.mxu0 0.0
      %829 = vmatpush1.msra.mxu0 0.0
      %830 = vmatprep.subr.mxu0 0.0
      %831 = vmatpush1.msra.mxu0 0.0
      %832 = vmatprep.subr.mxu0 0.0
      %833 = vmatpush1.msra.mxu0 0.0
      %834 = vmatprep.subr.mxu0 0.0
      %835 = vmatpush1.msra.mxu0 0.0
      %836 = vmatprep.subr.mxu0 0.0
      %837 = vmatpush1.msra.mxu0 0.0
      %838 = vmatprep.subr.mxu0 0.0
      %839 = vmatpush1.msra.mxu0 0.0
      %840 = vmatprep.subr.mxu0 0.0
      %841 = vmatpush1.msra.mxu0 0.0
      %842 = vmatprep.subr.mxu0 0.0
      %843 = vmatpush1.msra.mxu0 0.0
      %844 = vmatprep.subr.mxu0 0.0
      %845 = vmatpush1.msra.mxu0 0.0
      %846 = vmatprep.subr.mxu0 0.0
      %847 = vmatpush1.msra.mxu0 0.0
      %848 = vmatprep.subr.mxu0 0.0
      %849 = vmatpush1.msra.mxu0 0.0
      %850 = vmatprep.subr.mxu0 0.0
      %851 = vmatpush1.msra.mxu0 0.0
      %852 = vmatprep.subr.mxu0 0.0
      %853 = vmatpush1.msra.mxu0 0.0
      %854 = vmatprep.subr.mxu0 0.0
      %855 = vmatpush1.msra.mxu0 0.0
      %856 = vmatprep.mubr.f32.mxu0 0.0
      %857 = vmatmul.mubr.f32.gmra.mrb[0].mxu0 %v790
      %v858 = vpop.f32.mrb[0].mxu0
      %v859 = vadd.f32 0.0, %v858
      %v860 = vpop.f32.mrb[0].mxu0
      %861 = vdwg.mxu0
      %v862 = vadd.f32 %v788, %v859
      %863 = vst.msk [vmem:[%s781] sm:$0xff] %vm297, %v862
      %864 = vst.msk [vmem:[%s756] sm:$0xff] %vm396, %v761
      %s865 = scalar_lea.vmem %s249, 24
      %v866 = vld [vmem:[%s865] sm:$0xff]
      %v867 = vmul.f32 %v866, 0.17677669
      %s868 = scalar_lea.vmem %s258, 24
      %v869 = vld [vmem:[%s868] sm:$0xff]
      %s870 = scalar_lea.vmem %s267, 24
      %v871 = vld [vmem:[%s870] sm:$0xff]
      %v873 = vsel %vm297, %v867, 0
      %v876 = vsel %vm297, %v869, 0
      %878 = vmatprep.subr.mxu0 0.0
      %879 = vmatpush1.xpose.msra.mxu0 %v876
      %880 = vmatprep.subr.mxu0 0.0
      %881 = vmatpush1.xpose.msra.mxu0 0.0
      %882 = vmatprep.subr.mxu0 0.0
      %883 = vmatpush1.xpose.msra.mxu0 0.0
      %884 = vmatprep.subr.mxu0 0.0
      %885 = vmatpush1.xpose.msra.mxu0 0.0
      %886 = vmatprep.subr.mxu0 0.0
      %887 = vmatpush1.xpose.msra.mxu0 0.0
      %888 = vmatprep.subr.mxu0 0.0
      %889 = vmatpush1.xpose.msra.mxu0 0.0
      %890 = vmatprep.subr.mxu0 0.0
      %891 = vmatpush1.xpose.msra.mxu0 0.0
      %892 = vmatprep.subr.mxu0 0.0
      %893 = vmatpush1.xpose.msra.mxu0 0.0
      %894 = vmatprep.subr.mxu0 0.0
      %895 = vmatpush1.xpose.msra.mxu0 0.0
      %896 = vmatprep.subr.mxu0 0.0
      %897 = vmatpush1.xpose.msra.mxu0 0.0
      %898 = vmatprep.subr.mxu0 0.0
      %899 = vmatpush1.xpose.msra.mxu0 0.0
      %900 = vmatprep.subr.mxu0 0.0
      %901 = vmatpush1.xpose.msra.mxu0 0.0
      %902 = vmatprep.subr.mxu0 0.0
      %903 = vmatpush1.xpose.msra.mxu0 0.0
      %904 = vmatprep.subr.mxu0 0.0
      %905 = vmatpush1.xpose.msra.mxu0 0.0
      %906 = vmatprep.subr.mxu0 0.0
      %907 = vmatpush1.xpose.msra.mxu0 0.0
      %908 = vmatprep.subr.mxu0 0.0
      %909 = vmatpush1.xpose.msra.mxu0 0.0
      %910 = vmatprep.subr.mxu0 0.0
      %911 = vmatpush1.xpose.msra.mxu0 0.0
      %912 = vmatprep.subr.mxu0 0.0
      %913 = vmatpush1.xpose.msra.mxu0 0.0
      %914 = vmatprep.subr.mxu0 0.0
      %915 = vmatpush1.xpose.msra.mxu0 0.0
      %916 = vmatprep.subr.mxu0 0.0
      %917 = vmatpush1.xpose.msra.mxu0 0.0
      %918 = vmatprep.subr.mxu0 0.0
      %919 = vmatpush1.xpose.msra.mxu0 0.0
      %920 = vmatprep.subr.mxu0 0.0
      %921 = vmatpush1.xpose.msra.mxu0 0.0
      %922 = vmatprep.subr.mxu0 0.0
      %923 = vmatpush1.xpose.msra.mxu0 0.0
      %924 = vmatprep.subr.mxu0 0.0
      %925 = vmatpush1.xpose.msra.mxu0 0.0
      %926 = vmatprep.subr.mxu0 0.0
      %927 = vmatpush1.xpose.msra.mxu0 0.0
      %928 = vmatprep.subr.mxu0 0.0
      %929 = vmatpush1.xpose.msra.mxu0 0.0
      %930 = vmatprep.subr.mxu0 0.0
      %931 = vmatpush1.xpose.msra.mxu0 0.0
      %932 = vmatprep.subr.mxu0 0.0
      %933 = vmatpush1.xpose.msra.mxu0 0.0
      %934 = vmatprep.subr.mxu0 0.0
      %935 = vmatpush1.xpose.msra.mxu0 0.0
      %936 = vmatprep.subr.mxu0 0.0
      %937 = vmatpush1.xpose.msra.mxu0 0.0
      %938 = vmatprep.subr.mxu0 0.0
      %939 = vmatpush1.xpose.msra.mxu0 0.0
      %940 = vmatprep.subr.mxu0 0.0
      %941 = vmatpush1.xpose.msra.mxu0 0.0
      %942 = vmatprep.mubr.f32.mxu0 0.0
      %943 = vmatmul.mubr.f32.gmra.mrb[0].mxu0 %v873
      %v944 = vpop.f32.mrb[0].mxu0
      %v945 = vadd.f32 0.0, %v944
      %v946 = vpop.f32.mrb[0].mxu0
      %947 = vdwg.mxu0
      %s948 = scalar_lea.vmem [#allocation2], 24
      %v949 = vld [vmem:[%s948] sm:$0xff]
      %v950 = vsel %vm297, %v945, -inf
      %951 = vmax.xlane.f32.xlu0 %v950
      %v952 = vpop.xlane.xlu0 %951
      %v953 = vmax.f32 %v949, %v952
      %v954 = vsub.f32 %v949, %v953
      %v955 = vmul.f32 %v954, 1.442695
      %v956 = vpow.pop %v955
      %958 = vset.pattern.permute.xlu0 0
      %959 = vperm.xlu0 %958, %v953
      %v960 = vpop.permute.xlu0 %959
      %v962 = vsub.f32 %v945, %v960
      %v963 = vmul.f32 %v962, 1.442695
      %v964 = vpow.pop %v963
      %s965 = scalar_lea.vmem [#allocation3], 24
      %v966 = vld [vmem:[%s965] sm:$0xff]
      %v967 = vmul.f32 %v956, %v966
      %v968 = vsel %vm297, %v964, 0.0
      %969 = vadd.xlane.f32.xlu0 %v968
      %v970 = vpop.xlane.xlu0 %969
      %v971 = vadd.f32 %v967, %v970
      %972 = vst.msk [vmem:[%s965] sm:$0xff] %vm396, %v971
      %s973 = scalar_lea.vmem [#allocation4], 24
      %v974 = vld [vmem:[%s973] sm:$0xff]
      %976 = vset.pattern.permute.xlu0 0
      %977 = vperm.xlu0 %976, %v956
      %v978 = vpop.permute.xlu0 %977
      %v980 = vmul.f32 %v978, %v974
      %v982 = vsel %vm297, %v964, 0
      %984 = vmatprep.subr.mxu0 0.0
      %985 = vmatpush1.msra.mxu0 %v871
      %986 = vmatprep.subr.mxu0 0.0
      %987 = vmatpush1.msra.mxu0 0.0
      %988 = vmatprep.subr.mxu0 0.0
      %989 = vmatpush1.msra.mxu0 0.0
      %990 = vmatprep.subr.mxu0 0.0
      %991 = vmatpush1.msra.mxu0 0.0
      %992 = vmatprep.subr.mxu0 0.0
      %993 = vmatpush1.msra.mxu0 0.0
      %994 = vmatprep.subr.mxu0 0.0
      %995 = vmatpush1.msra.mxu0 0.0
      %996 = vmatprep.subr.mxu0 0.0
      %997 = vmatpush1.msra.mxu0 0.0
      %998 = vmatprep.subr.mxu0 0.0
      %999 = vmatpush1.msra.mxu0 0.0
      %1000 = vmatprep.subr.mxu0 0.0
      %1001 = vmatpush1.msra.mxu0 0.0
      %1002 = vmatprep.subr.mxu0 0.0
      %1003 = vmatpush1.msra.mxu0 0.0
      %1004 = vmatprep.subr.mxu0 0.0
      %1005 = vmatpush1.msra.mxu0 0.0
      %1006 = vmatprep.subr.mxu0 0.0
      %1007 = vmatpush1.msra.mxu0 0.0
      %1008 = vmatprep.subr.mxu0 0.0
      %1009 = vmatpush1.msra.mxu0 0.0
      %1010 = vmatprep.subr.mxu0 0.0
      %1011 = vmatpush1.msra.mxu0 0.0
      %1012 = vmatprep.subr.mxu0 0.0
      %1013 = vmatpush1.msra.mxu0 0.0
      %1014 = vmatprep.subr.mxu0 0.0
      %1015 = vmatpush1.msra.mxu0 0.0
      %1016 = vmatprep.subr.mxu0 0.0
      %1017 = vmatpush1.msra.mxu0 0.0
      %1018 = vmatprep.subr.mxu0 0.0
      %1019 = vmatpush1.msra.mxu0 0.0
      %1020 = vmatprep.subr.mxu0 0.0
      %1021 = vmatpush1.msra.mxu0 0.0
      %1022 = vmatprep.subr.mxu0 0.0
      %1023 = vmatpush1.msra.mxu0 0.0
      %1024 = vmatprep.subr.mxu0 0.0
      %1025 = vmatpush1.msra.mxu0 0.0
      %1026 = vmatprep.subr.mxu0 0.0
      %1027 = vmatpush1.msra.mxu0 0.0
      %1028 = vmatprep.subr.mxu0 0.0
      %1029 = vmatpush1.msra.mxu0 0.0
      %1030 = vmatprep.subr.mxu0 0.0
      %1031 = vmatpush1.msra.mxu0 0.0
      %1032 = vmatprep.subr.mxu0 0.0
      %1033 = vmatpush1.msra.mxu0 0.0
      %1034 = vmatprep.subr.mxu0 0.0
      %1035 = vmatpush1.msra.mxu0 0.0
      %1036 = vmatprep.subr.mxu0 0.0
      %1037 = vmatpush1.msra.mxu0 0.0
      %1038 = vmatprep.subr.mxu0 0.0
      %1039 = vmatpush1.msra.mxu0 0.0
      %1040 = vmatprep.subr.mxu0 0.0
      %1041 = vmatpush1.msra.mxu0 0.0
      %1042 = vmatprep.subr.mxu0 0.0
      %1043 = vmatpush1.msra.mxu0 0.0
      %1044 = vmatprep.subr.mxu0 0.0
      %1045 = vmatpush1.msra.mxu0 0.0
      %1046 = vmatprep.subr.mxu0 0.0
      %1047 = vmatpush1.msra.mxu0 0.0
      %1048 = vmatprep.mubr.f32.mxu0 0.0
      %1049 = vmatmul.mubr.f32.gmra.mrb[0].mxu0 %v982
      %v1050 = vpop.f32.mrb[0].mxu0
      %v1051 = vadd.f32 0.0, %v1050
      %v1052 = vpop.f32.mrb[0].mxu0
      %1053 = vdwg.mxu0
      %v1054 = vadd.f32 %v980, %v1051
      %1055 = vst.msk [vmem:[%s973] sm:$0xff] %vm297, %v1054
      %1056 = vst.msk [vmem:[%s948] sm:$0xff] %vm396, %v953
      // Predicated region
      $region37: #{attention_forward.4} parent=31 // pred_check
        %p1057 = pneg %p275
      $region38: #{attention_forward.4} parent=31 // pred_check_branch
        %1059 = sbr.rel (%p1057) target = $region40
      $region39: #{attention_forward.4} parent=31 // pred_region
        %v1060 = vld [vmem:[#allocation3] sm:$0xff]
        %v1061 = vrcp.pop %v1060
        %v1062 = vmul.f32 %v1060, %v1061
        %v1063 = vsub.f32 2.0, %v1062
        %v1064 = vmul.f32 %v1061, %v1063
        %v1065 = vld [vmem:[#allocation4] sm:$0xff]
        %1067 = vset.pattern.permute.xlu0 0
        %1068 = vperm.xlu0 %1067, %v1064
        %v1069 = vpop.permute.xlu0 %1068
        %v1071 = vmul.f32 %v1065, %v1069
        %1072 = vst.msk [vmem:[%s274] sm:$0xff] %vm297, %v1071
        %v1073 = vld [vmem:[%s581] sm:$0xff]
        %v1074 = vrcp.pop %v1073
        %v1075 = vmul.f32 %v1073, %v1074
        %v1076 = vsub.f32 2.0, %v1075
        %v1077 = vmul.f32 %v1074, %v1076
        %v1078 = vld [vmem:[%s589] sm:$0xff]
        %1080 = vset.pattern.permute.xlu0 0
        %1081 = vperm.xlu0 %1080, %v1077
        %v1082 = vpop.permute.xlu0 %1081
        %v1084 = vmul.f32 %v1078, %v1082
        %1086 = vrot.lane.b32.xlu0 %v1084, 8
        %v1087 = vpop.permute.xlu0 %1086
        %vm1089 = vcmask 130112
        %1090 = vst.msk [vmem:[%s274] sm:$0xff] %vm1089, %v1087
        %v1091 = vld [vmem:[%s773] sm:$0xff]
        %v1092 = vrcp.pop %v1091
        %v1093 = vmul.f32 %v1091, %v1092
        %v1094 = vsub.f32 2.0, %v1093
        %v1095 = vmul.f32 %v1092, %v1094
        %v1096 = vld [vmem:[%s781] sm:$0xff]
        %1098 = vset.pattern.permute.xlu0 0
        %1099 = vperm.xlu0 %1098, %v1095
        %v1100 = vpop.permute.xlu0 %1099
        %v1102 = vmul.f32 %v1096, %v1100
        %1104 = vrot.lane.b32.xlu0 %v1102, 16
        %v1105 = vpop.permute.xlu0 %1104
        %vm1107 = vcmask 195712
        %1108 = vst.msk [vmem:[%s274] sm:$0xff] %vm1107, %v1105
        %v1109 = vld [vmem:[%s965] sm:$0xff]
        %v1110 = vrcp.pop %v1109
        %v1111 = vmul.f32 %v1109, %v1110
        %v1112 = vsub.f32 2.0, %v1111
        %v1113 = vmul.f32 %v1110, %v1112
        %v1114 = vld [vmem:[%s973] sm:$0xff]
        %1116 = vset.pattern.permute.xlu0 0
        %1117 = vperm.xlu0 %1116, %v1113
        %v1118 = vpop.permute.xlu0 %1117
        %v1120 = vmul.f32 %v1114, %v1118
        %1122 = vrot.lane.b32.xlu0 %v1120, 24
        %v1123 = vpop.permute.xlu0 %1122
        %vm1125 = vcmask 261312
        %1126 = vst.msk [vmem:[%s274] sm:$0xff] %vm1125, %v1123
      $region40: #{attention_forward.4} parent=31 // pred_fallthru
        _
      %p1127 = scmp.lt.s32.totalorder %s19, 1
      %s1128 = scalar_select %p1127, %s19, 1
      %p1129 = scmp.lt.s32.totalorder %s20, 0
      %s1130 = scalar_select %p1129, %s20, 0
      %s1131 = sadd.s32 %s1130, %s1128
      %s1132 = smul.addr %s1131, 8
      %s1133 = scalar_lea.vmem %s3, %s1132
      // Predicated region
      $region41: #{attention_forward.4} parent=31 // pred_check
        %p1134 = pneg %p137
      $region42: #{attention_forward.4} parent=31 // pred_check_branch
        %1136 = sbr.rel (%p1134) target = $region44
      $region43: #{attention_forward.4} parent=31 // pred_region
        _
      $region44: #{attention_forward.4} parent=31 // pred_fallthru
        _
    $region32: #{attention_forward.4} parent=5 // pred_fallthru
      _
    %p1137 = scmp.le.s32.totalorder 2, %s9
    // Predicated region
    $region45: #{attention_forward.4} parent=5 // pred_check
      %p1138 = pneg %p1137
    $region46: #{attention_forward.4} parent=5 // pred_check_branch
      %1140 = sbr.rel (%p1138) target = $region48
    $region47: #{attention_forward.4} parent=5 // pred_region
      %s1141 = ssub.s32 %s9, 2
      // Predicated region
      $region49: #{attention_forward.4} parent=47 // pred_check
        %p1142 = pneg %p143
      $region50: #{attention_forward.4} parent=47 // pred_check_branch
        %1144 = sbr.rel (%p1142) target = $region52
      $region51: #{attention_forward.4} parent=47 // pred_region
        %p1145 = scmp.lt.s32.totalorder %s22, 1
        %s1146 = scalar_select %p1145, %s22, 1
        %p1147 = scmp.lt.s32.totalorder %s23, 0
        %s1148 = scalar_select %p1147, %s23, 0
        %s1149 = sadd.s32 %s1148, %s1146
        %s1150 = smul.addr %s1149, 8
        %s1151 = scalar_lea.vmem %s3, %s1150
      $region52: #{attention_forward.4} parent=47 // pred_fallthru
        _
    $region48: #{attention_forward.4} parent=5 // pred_fallthru
      _
  $region6: #{attention_forward.4} parent=0 // loop_footer
    %s13 = sadd.s32 1, %s9
  $region7: #{attention_forward.4} parent=0 // loop_footer_branch
    %8 = sbr.rel target = $region3
  $region8: #{attention_forward.4} parent=0 // loop_exit
    _

</llo_original>
